<compile_context>
chip_gen: v7x
topology: tpu7x:2x2x1
jax: 0.10.0
libtpu: 0.0.40
codegen_flags: <defaults>
</compile_context>

<pallas_src>
import functools

import jax
import jax.numpy as jnp
import numpy as np
from jax import lax
from jax.experimental import pallas as pl
from jax.experimental.pallas import tpu as pltpu


def _relu6(x):
    return jnp.clip(x, 0.0, 6.0)


def _ir_kernel(*refs, stride, dilation, H, W, Ho, Wo, use_res, has_expand):
    if has_expand:
        (x_ref, w1_ref, b1_ref, wdw_ref, bdw_ref, w2_ref, b2_ref, o_ref) = refs
    else:
        (x_ref, wdw_ref, bdw_ref, w2_ref, b2_ref, o_ref) = refs

    x = x_ref[0].astype(jnp.float32)          # (H, W, Cin) -- channels on lanes
    cin = x.shape[-1]

    # ---- 1x1 expand conv (+ folded BN bias) + ReLU6 : MXU matmul ----
    if has_expand:
        hid = w1_ref.shape[1]
        h = jnp.dot(x.reshape(H * W, cin), w1_ref[...],
                    preferred_element_type=jnp.float32)
        h = _relu6(h + b1_ref[...]).reshape(H, W, hid)
    else:
        hid = cin
        h = x

    # ---- 3x3 depthwise conv, padding=1 (zero pad built in VMEM) ----
    pad = 1
    zrow = jnp.zeros((pad, W, hid), jnp.float32)
    hp = jnp.concatenate([zrow, h, zrow], axis=0)            # (H+2, W, hid)
    zcol = jnp.zeros((H + 2 * pad, pad, hid), jnp.float32)
    hp = jnp.concatenate([zcol, hp, zcol], axis=1)           # (H+2, W+2, hid)

    wtaps = wdw_ref[...]                                     # (9, hid), BN-folded
    acc = None
    for di in range(3):
        for dj in range(3):
            rs = di * dilation
            cs = dj * dilation
            win = hp[rs: rs + stride * (Ho - 1) + 1: stride,
                     cs: cs + stride * (Wo - 1) + 1: stride, :]   # (Ho, Wo, hid)
            dd = di * 3 + dj
            term = win * wtaps[dd:dd + 1, :]                 # lane-broadcast weight
            acc = term if acc is None else acc + term
    h2 = _relu6(acc + bdw_ref[...])                          # (Ho, Wo, hid)

    # ---- 1x1 project conv (+ folded BN bias) : MXU matmul ----
    out = jnp.dot(h2.reshape(Ho * Wo, hid), w2_ref[...],
                  preferred_element_type=jnp.float32) + b2_ref[...]
    out = out.reshape(Ho, Wo, -1)

    if use_res:
        out = out + x

    o_ref[0] = out.astype(o_ref.dtype)


def _fold_bn(w, bn, eps=1e-5):
    """Fold eval-mode BatchNorm into conv weights; returns (folded_w, bias)."""
    scale = bn["gamma"] / jnp.sqrt(bn["var"] + eps)
    wf = w * scale.reshape((-1,) + (1,) * (w.ndim - 1))
    bias = bn["beta"] - bn["mean"] * scale
    return wf, bias


def inverted_residual(x, params, *, stride=1, expansion=6, dilation=1):
    """x: (N, Cin, H, W) NCHW (PyTorch layout). Returns (N, oup, Ho, Wo)."""
    if x.ndim != 4:
        raise ValueError("InvertedResidual requires a 4D NCHW tensor")
    assert stride in (1, 2)
    N, Cin, H, W = x.shape
    has_expand = expansion != 1
    hidden = params["w_dw"].shape[0]
    oup = params["w_proj"].shape[0]
    use_res = (stride == 1 and Cin == oup)

    pad = 1
    Ho = (H + 2 * pad - dilation * 2 - 1) // stride + 1
    Wo = (W + 2 * pad - dilation * 2 - 1) // stride + 1

    args = []
    in_specs = [pl.BlockSpec((1, H, W, Cin), lambda n: (n, 0, 0, 0))]

    if has_expand:
        w1, b1 = _fold_bn(params["w_exp"], params["bn1"])
        w1 = jnp.transpose(w1[:, :, 0, 0]).astype(jnp.float32)       # (Cin, hidden)
        b1 = b1.reshape(1, hidden).astype(jnp.float32)
        args += [w1, b1]
        in_specs += [pl.BlockSpec((Cin, hidden), lambda n: (0, 0)),
                     pl.BlockSpec((1, hidden), lambda n: (0, 0))]

    wdw, bdw = _fold_bn(params["w_dw"], params["bn2"])
    wdw = jnp.transpose(wdw[:, 0, :, :], (1, 2, 0)).reshape(9, hidden)
    wdw = wdw.astype(jnp.float32)                                     # (9, hidden)
    bdw = bdw.reshape(1, hidden).astype(jnp.float32)

    w2, b2 = _fold_bn(params["w_proj"], params["bn3"])
    w2 = jnp.transpose(w2[:, :, 0, 0]).astype(jnp.float32)            # (hidden, oup)
    b2 = b2.reshape(1, oup).astype(jnp.float32)

    args += [wdw, bdw, w2, b2]
    in_specs += [pl.BlockSpec((9, hidden), lambda n: (0, 0)),
                 pl.BlockSpec((1, hidden), lambda n: (0, 0)),
                 pl.BlockSpec((hidden, oup), lambda n: (0, 0)),
                 pl.BlockSpec((1, oup), lambda n: (0, 0))]

    # NHWC internally: channels on the lane axis (layout glue stays in XLA).
    x_nhwc = jnp.transpose(x, (0, 2, 3, 1))

    kernel = functools.partial(
        _ir_kernel, stride=stride, dilation=dilation,
        H=H, W=W, Ho=Ho, Wo=Wo, use_res=use_res, has_expand=has_expand)

    out_nhwc = pl.pallas_call(
        kernel,
        out_shape=jax.ShapeDtypeStruct((N, Ho, Wo, oup), x.dtype),
        grid=(N,),
        in_specs=in_specs,
        out_specs=pl.BlockSpec((1, Ho, Wo, oup), lambda n: (n, 0, 0, 0)),
        compiler_params=pltpu.CompilerParams(
            dimension_semantics=("parallel",)),
    )(x_nhwc, *args)

    return jnp.transpose(out_nhwc, (0, 3, 1, 2))


# ---------------------------------------------------------------------------
# Pure-JAX reference (mirrors the PyTorch module, eval-mode BatchNorm).
# ---------------------------------------------------------------------------
def _reference(x, params, *, stride=1, expansion=6, dilation=1, eps=1e-5):
    def bn(y, p):
        s = p["gamma"] / jnp.sqrt(p["var"] + eps)
        return (y * s[None, :, None, None]
                + (p["beta"] - p["mean"] * s)[None, :, None, None])

    Cin = x.shape[1]
    oup = params["w_proj"].shape[0]
    hidden = params["w_dw"].shape[0]
    h = x.astype(jnp.float32)
    if expansion != 1:
        h = lax.conv_general_dilated(
            h, params["w_exp"].astype(jnp.float32), (1, 1), "VALID",
            dimension_numbers=("NCHW", "OIHW", "NCHW"))
        h = jnp.clip(bn(h, params["bn1"]), 0.0, 6.0)
    h = lax.conv_general_dilated(
        h, params["w_dw"].astype(jnp.float32), (stride, stride),
        [(1, 1), (1, 1)], rhs_dilation=(dilation, dilation),
        dimension_numbers=("NCHW", "OIHW", "NCHW"),
        feature_group_count=hidden)
    h = jnp.clip(bn(h, params["bn2"]), 0.0, 6.0)
    h = lax.conv_general_dilated(
        h, params["w_proj"].astype(jnp.float32), (1, 1), "VALID",
        dimension_numbers=("NCHW", "OIHW", "NCHW"))
    h = bn(h, params["bn3"])
    if stride == 1 and Cin == oup:
        h = x.astype(jnp.float32) + h
    return h.astype(x.dtype)


def _init_params(key, inp, oup, expansion):
    hidden = int(round(inp * expansion))
    ks = jax.random.split(key, 6)

    def bn_params(k, c):
        k1, k2, k3, k4 = jax.random.split(k, 4)
        return {"gamma": jax.random.uniform(k1, (c,), minval=0.5, maxval=1.5),
                "beta": jax.random.normal(k2, (c,)) * 0.1,
                "mean": jax.random.normal(k3, (c,)) * 0.1,
                "var": jax.random.uniform(k4, (c,), minval=0.5, maxval=1.5)}

    params = {}
    if expansion != 1:
        params["w_exp"] = jax.random.normal(ks[0], (hidden, inp, 1, 1)) * 0.3
        params["bn1"] = bn_params(ks[1], hidden)
    params["w_dw"] = jax.random.normal(ks[2], (hidden, 1, 3, 3)) * 0.3
    params["bn2"] = bn_params(ks[3], hidden)
    params["w_proj"] = jax.random.normal(ks[4], (oup, hidden, 1, 1)) * 0.3
    params["bn3"] = bn_params(ks[5], oup)
    return params


if __name__ == "__main__":
    # Small config consistent with the module: stride=1, inp==oup -> residual path.
    N, inp, H, W = 2, 4, 16, 16
    oup, stride, expansion, dilation = 4, 1, 6, 1   # hidden_dim = 24

    key = jax.random.PRNGKey(0)
    kx, kp = jax.random.split(key)
    x = jax.random.normal(kx, (N, inp, H, W), dtype=jnp.float32)
    params = _init_params(kp, inp, oup, expansion)

    out = jax.block_until_ready(
        inverted_residual(x, params, stride=stride, expansion=expansion,
                          dilation=dilation))
    ref = jax.block_until_ready(
        _reference(x, params, stride=stride, expansion=expansion,
                   dilation=dilation))

    assert out.shape == ref.shape == (N, oup, H, W)
    np.testing.assert_allclose(np.asarray(out), np.asarray(ref),
                               atol=2e-2, rtol=2e-2)

    print("KERNEL_OK")
</pallas_src>

<mosaic_0001>
module attributes {stable_mosaic.version = 11 : i64} {
  func.func @_ir_kernel(%arg0: i32, %arg1: memref<1x16x16x4xf32, #tpu.memory_space<vmem>>, %arg2: memref<4x24xf32, #tpu.memory_space<vmem>>, %arg3: memref<1x24xf32, #tpu.memory_space<vmem>>, %arg4: memref<9x24xf32, #tpu.memory_space<vmem>>, %arg5: memref<1x24xf32, #tpu.memory_space<vmem>>, %arg6: memref<24x4xf32, #tpu.memory_space<vmem>>, %arg7: memref<1x4xf32, #tpu.memory_space<vmem>>, %arg8: memref<1x16x16x4xf32, #tpu.memory_space<vmem>>) attributes {dimension_semantics = [#tpu.dimension_semantics<parallel>], iteration_bounds = array<i64: 2>, scalar_prefetch = 0 : i64, scratch_operands = 0 : i64, tpu.core_type = #tpu.core_type<tc>, window_params = [{transform_indices = @transform_0, window_bounds = array<i64: 1, 16, 16, 4>}, {pipeline_mode = #tpu.pipeline_mode<synchronous>, transform_indices = @transform_1, window_bounds = array<i64: 4, 24>}, {pipeline_mode = #tpu.pipeline_mode<synchronous>, transform_indices = @transform_2, window_bounds = array<i64: 1, 24>}, {pipeline_mode = #tpu.pipeline_mode<synchronous>, transform_indices = @transform_3, window_bounds = array<i64: 9, 24>}, {pipeline_mode = #tpu.pipeline_mode<synchronous>, transform_indices = @transform_4, window_bounds = array<i64: 1, 24>}, {pipeline_mode = #tpu.pipeline_mode<synchronous>, transform_indices = @transform_5, window_bounds = array<i64: 24, 4>}, {pipeline_mode = #tpu.pipeline_mode<synchronous>, transform_indices = @transform_6, window_bounds = array<i64: 1, 4>}, {transform_indices = @transform_7, window_bounds = array<i64: 1, 16, 16, 4>}]} {
    %c0 = arith.constant 0 : index
    %c0_0 = arith.constant 0 : index
    %c0_1 = arith.constant 0 : index
    %c0_2 = arith.constant 0 : index
    %0 = vector.load %arg1[%c0, %c0_0, %c0_1, %c0_2] : memref<1x16x16x4xf32, #tpu.memory_space<vmem>>, vector<1x16x16x4xf32>
    %1 = vector.shape_cast %0 : vector<1x16x16x4xf32> to vector<16x16x4xf32>
    %2 = vector.shape_cast %1 : vector<16x16x4xf32> to vector<256x4xf32>
    %c0_3 = arith.constant 0 : index
    %c0_4 = arith.constant 0 : index
    %3 = vector.load %arg2[%c0_3, %c0_4] : memref<4x24xf32, #tpu.memory_space<vmem>>, vector<4x24xf32>
    %cst = arith.constant dense<0.000000e+00> : vector<256x24xf32>
    %4 = tpu.matmul %2, %3, %cst {dimension_numbers = #tpu.dot_dimension_numbers<[1], [0], [0], [1], [0, 0, 1, 1], [], []>} : vector<256x4xf32>, vector<4x24xf32>, vector<256x24xf32> -> vector<256x24xf32>
    %c0_5 = arith.constant 0 : index
    %c0_6 = arith.constant 0 : index
    %5 = vector.load %arg3[%c0_5, %c0_6] : memref<1x24xf32, #tpu.memory_space<vmem>>, vector<1x24xf32>
    %6 = vector.broadcast %5 : vector<1x24xf32> to vector<256x24xf32>
    %7 = arith.addf %4, %6 : vector<256x24xf32>
    %cst_7 = arith.constant 0.000000e+00 : f32
    %cst_8 = arith.constant 6.000000e+00 : f32
    %8 = vector.broadcast %cst_7 : f32 to vector<256x24xf32>
    %9 = arith.maximumf %8, %7 : vector<256x24xf32>
    %10 = vector.broadcast %cst_8 : f32 to vector<256x24xf32>
    %11 = arith.minimumf %10, %9 : vector<256x24xf32>
    %12 = vector.shape_cast %11 : vector<256x24xf32> to vector<16x16x24xf32>
    %cst_9 = arith.constant 0.000000e+00 : f32
    %13 = vector.broadcast %cst_9 : f32 to vector<1x16x24xf32>
    %14 = tpu.concatenate %13, %12, %13 in 0 : vector<1x16x24xf32>, vector<16x16x24xf32>, vector<1x16x24xf32> -> vector<18x16x24xf32>
    %cst_10 = arith.constant 0.000000e+00 : f32
    %15 = vector.broadcast %cst_10 : f32 to vector<18x1x24xf32>
    %16 = tpu.concatenate %15, %14, %15 in 1 : vector<18x1x24xf32>, vector<18x16x24xf32>, vector<18x1x24xf32> -> vector<18x18x24xf32>
    %c0_11 = arith.constant 0 : index
    %c0_12 = arith.constant 0 : index
    %17 = vector.load %arg4[%c0_11, %c0_12] : memref<9x24xf32, #tpu.memory_space<vmem>>, vector<9x24xf32>
    %18 = vector.extract_strided_slice %16 {offsets = [0, 0, 0], sizes = [16, 16, 24], strides = [1, 1, 1]} : vector<18x18x24xf32> to vector<16x16x24xf32>
    %19 = vector.extract_strided_slice %17 {offsets = [0, 0], sizes = [1, 24], strides = [1, 1]} : vector<9x24xf32> to vector<1x24xf32>
    %20 = vector.shape_cast %19 : vector<1x24xf32> to vector<1x1x24xf32>
    %21 = vector.broadcast %20 : vector<1x1x24xf32> to vector<16x16x24xf32>
    %22 = arith.mulf %18, %21 : vector<16x16x24xf32>
    %23 = vector.extract_strided_slice %16 {offsets = [0, 1, 0], sizes = [16, 16, 24], strides = [1, 1, 1]} : vector<18x18x24xf32> to vector<16x16x24xf32>
    %24 = vector.extract_strided_slice %17 {offsets = [1, 0], sizes = [1, 24], strides = [1, 1]} : vector<9x24xf32> to vector<1x24xf32>
    %25 = vector.shape_cast %24 : vector<1x24xf32> to vector<1x1x24xf32>
    %26 = vector.broadcast %25 : vector<1x1x24xf32> to vector<16x16x24xf32>
    %27 = arith.mulf %23, %26 : vector<16x16x24xf32>
    %28 = arith.addf %22, %27 : vector<16x16x24xf32>
    %29 = vector.extract_strided_slice %16 {offsets = [0, 2, 0], sizes = [16, 16, 24], strides = [1, 1, 1]} : vector<18x18x24xf32> to vector<16x16x24xf32>
    %30 = vector.extract_strided_slice %17 {offsets = [2, 0], sizes = [1, 24], strides = [1, 1]} : vector<9x24xf32> to vector<1x24xf32>
    %31 = vector.shape_cast %30 : vector<1x24xf32> to vector<1x1x24xf32>
    %32 = vector.broadcast %31 : vector<1x1x24xf32> to vector<16x16x24xf32>
    %33 = arith.mulf %29, %32 : vector<16x16x24xf32>
    %34 = arith.addf %28, %33 : vector<16x16x24xf32>
    %35 = vector.extract_strided_slice %16 {offsets = [1, 0, 0], sizes = [16, 16, 24], strides = [1, 1, 1]} : vector<18x18x24xf32> to vector<16x16x24xf32>
    %36 = vector.extract_strided_slice %17 {offsets = [3, 0], sizes = [1, 24], strides = [1, 1]} : vector<9x24xf32> to vector<1x24xf32>
    %37 = vector.shape_cast %36 : vector<1x24xf32> to vector<1x1x24xf32>
    %38 = vector.broadcast %37 : vector<1x1x24xf32> to vector<16x16x24xf32>
    %39 = arith.mulf %35, %38 : vector<16x16x24xf32>
    %40 = arith.addf %34, %39 : vector<16x16x24xf32>
    %41 = vector.extract_strided_slice %16 {offsets = [1, 1, 0], sizes = [16, 16, 24], strides = [1, 1, 1]} : vector<18x18x24xf32> to vector<16x16x24xf32>
    %42 = vector.extract_strided_slice %17 {offsets = [4, 0], sizes = [1, 24], strides = [1, 1]} : vector<9x24xf32> to vector<1x24xf32>
    %43 = vector.shape_cast %42 : vector<1x24xf32> to vector<1x1x24xf32>
    %44 = vector.broadcast %43 : vector<1x1x24xf32> to vector<16x16x24xf32>
    %45 = arith.mulf %41, %44 : vector<16x16x24xf32>
    %46 = arith.addf %40, %45 : vector<16x16x24xf32>
    %47 = vector.extract_strided_slice %16 {offsets = [1, 2, 0], sizes = [16, 16, 24], strides = [1, 1, 1]} : vector<18x18x24xf32> to vector<16x16x24xf32>
    %48 = vector.extract_strided_slice %17 {offsets = [5, 0], sizes = [1, 24], strides = [1, 1]} : vector<9x24xf32> to vector<1x24xf32>
    %49 = vector.shape_cast %48 : vector<1x24xf32> to vector<1x1x24xf32>
    %50 = vector.broadcast %49 : vector<1x1x24xf32> to vector<16x16x24xf32>
    %51 = arith.mulf %47, %50 : vector<16x16x24xf32>
    %52 = arith.addf %46, %51 : vector<16x16x24xf32>
    %53 = vector.extract_strided_slice %16 {offsets = [2, 0, 0], sizes = [16, 16, 24], strides = [1, 1, 1]} : vector<18x18x24xf32> to vector<16x16x24xf32>
    %54 = vector.extract_strided_slice %17 {offsets = [6, 0], sizes = [1, 24], strides = [1, 1]} : vector<9x24xf32> to vector<1x24xf32>
    %55 = vector.shape_cast %54 : vector<1x24xf32> to vector<1x1x24xf32>
    %56 = vector.broadcast %55 : vector<1x1x24xf32> to vector<16x16x24xf32>
    %57 = arith.mulf %53, %56 : vector<16x16x24xf32>
    %58 = arith.addf %52, %57 : vector<16x16x24xf32>
    %59 = vector.extract_strided_slice %16 {offsets = [2, 1, 0], sizes = [16, 16, 24], strides = [1, 1, 1]} : vector<18x18x24xf32> to vector<16x16x24xf32>
    %60 = vector.extract_strided_slice %17 {offsets = [7, 0], sizes = [1, 24], strides = [1, 1]} : vector<9x24xf32> to vector<1x24xf32>
    %61 = vector.shape_cast %60 : vector<1x24xf32> to vector<1x1x24xf32>
    %62 = vector.broadcast %61 : vector<1x1x24xf32> to vector<16x16x24xf32>
    %63 = arith.mulf %59, %62 : vector<16x16x24xf32>
    %64 = arith.addf %58, %63 : vector<16x16x24xf32>
    %65 = vector.extract_strided_slice %16 {offsets = [2, 2, 0], sizes = [16, 16, 24], strides = [1, 1, 1]} : vector<18x18x24xf32> to vector<16x16x24xf32>
    %66 = vector.extract_strided_slice %17 {offsets = [8, 0], sizes = [1, 24], strides = [1, 1]} : vector<9x24xf32> to vector<1x24xf32>
    %67 = vector.shape_cast %66 : vector<1x24xf32> to vector<1x1x24xf32>
    %68 = vector.broadcast %67 : vector<1x1x24xf32> to vector<16x16x24xf32>
    %69 = arith.mulf %65, %68 : vector<16x16x24xf32>
    %70 = arith.addf %64, %69 : vector<16x16x24xf32>
    %c0_13 = arith.constant 0 : index
    %c0_14 = arith.constant 0 : index
    %71 = vector.load %arg5[%c0_13, %c0_14] : memref<1x24xf32, #tpu.memory_space<vmem>>, vector<1x24xf32>
    %72 = vector.shape_cast %71 : vector<1x24xf32> to vector<1x1x24xf32>
    %73 = vector.broadcast %72 : vector<1x1x24xf32> to vector<16x16x24xf32>
    %74 = arith.addf %70, %73 : vector<16x16x24xf32>
    %cst_15 = arith.constant 0.000000e+00 : f32
    %cst_16 = arith.constant 6.000000e+00 : f32
    %75 = vector.broadcast %cst_15 : f32 to vector<16x16x24xf32>
    %76 = arith.maximumf %75, %74 : vector<16x16x24xf32>
    %77 = vector.broadcast %cst_16 : f32 to vector<16x16x24xf32>
    %78 = arith.minimumf %77, %76 : vector<16x16x24xf32>
    %79 = vector.shape_cast %78 : vector<16x16x24xf32> to vector<256x24xf32>
    %c0_17 = arith.constant 0 : index
    %c0_18 = arith.constant 0 : index
    %80 = vector.load %arg6[%c0_17, %c0_18] : memref<24x4xf32, #tpu.memory_space<vmem>>, vector<24x4xf32>
    %cst_19 = arith.constant dense<0.000000e+00> : vector<256x4xf32>
    %81 = tpu.matmul %79, %80, %cst_19 {dimension_numbers = #tpu.dot_dimension_numbers<[1], [0], [0], [1], [0, 0, 1, 1], [], []>} : vector<256x24xf32>, vector<24x4xf32>, vector<256x4xf32> -> vector<256x4xf32>
    %c0_20 = arith.constant 0 : index
    %c0_21 = arith.constant 0 : index
    %82 = vector.load %arg7[%c0_20, %c0_21] : memref<1x4xf32, #tpu.memory_space<vmem>>, vector<1x4xf32>
    %83 = vector.broadcast %82 : vector<1x4xf32> to vector<256x4xf32>
    %84 = arith.addf %81, %83 : vector<256x4xf32>
    %85 = vector.shape_cast %84 : vector<256x4xf32> to vector<16x16x4xf32>
    %86 = arith.addf %85, %1 : vector<16x16x4xf32>
    %c0_22 = arith.constant 0 : index
    %c0_23 = arith.constant 0 : index
    %c0_24 = arith.constant 0 : index
    %c0_25 = arith.constant 0 : index
    %87 = vector.load %arg8[%c0_22, %c0_23, %c0_24, %c0_25] : memref<1x16x16x4xf32, #tpu.memory_space<vmem>>, vector<1x16x16x4xf32>
    %88 = vector.shape_cast %87 : vector<1x16x16x4xf32> to vector<16x16x4xf32>
    %89 = vector.shape_cast %86 : vector<16x16x4xf32> to vector<1x16x16x4xf32>
    tpu.vector_store %arg8[%c0_22, %c0_23, %c0_24, %c0_25], %89 {strides = array<i32>} : memref<1x16x16x4xf32, #tpu.memory_space<vmem>>, vector<1x16x16x4xf32>,
    return
  }
  func.func @transform_0(%arg0: i32) -> (i32, i32, i32, i32) {
    %c0_i32 = arith.constant 0 : i32
    %c0_i32_0 = arith.constant 0 : i32
    %c0_i32_1 = arith.constant 0 : i32
    %c0_i32_2 = arith.constant 0 : i32
    return %arg0, %c0_i32, %c0_i32_0, %c0_i32_1 : i32, i32, i32, i32
  }
  func.func @transform_1(%arg0: i32) -> (i32, i32) {
    %c0_i32 = arith.constant 0 : i32
    %c0_i32_0 = arith.constant 0 : i32
    %c0_i32_1 = arith.constant 0 : i32
    return %c0_i32, %c0_i32_0 : i32, i32
  }
  func.func @transform_2(%arg0: i32) -> (i32, i32) {
    %c0_i32 = arith.constant 0 : i32
    %c0_i32_0 = arith.constant 0 : i32
    %c0_i32_1 = arith.constant 0 : i32
    return %c0_i32, %c0_i32_0 : i32, i32
  }
  func.func @transform_3(%arg0: i32) -> (i32, i32) {
    %c0_i32 = arith.constant 0 : i32
    %c0_i32_0 = arith.constant 0 : i32
    %c0_i32_1 = arith.constant 0 : i32
    return %c0_i32, %c0_i32_0 : i32, i32
  }
  func.func @transform_4(%arg0: i32) -> (i32, i32) {
    %c0_i32 = arith.constant 0 : i32
    %c0_i32_0 = arith.constant 0 : i32
    %c0_i32_1 = arith.constant 0 : i32
    return %c0_i32, %c0_i32_0 : i32, i32
  }
  func.func @transform_5(%arg0: i32) -> (i32, i32) {
    %c0_i32 = arith.constant 0 : i32
    %c0_i32_0 = arith.constant 0 : i32
    %c0_i32_1 = arith.constant 0 : i32
    return %c0_i32, %c0_i32_0 : i32, i32
  }
  func.func @transform_6(%arg0: i32) -> (i32, i32) {
    %c0_i32 = arith.constant 0 : i32
    %c0_i32_0 = arith.constant 0 : i32
    %c0_i32_1 = arith.constant 0 : i32
    return %c0_i32, %c0_i32_0 : i32, i32
  }
  func.func @transform_7(%arg0: i32) -> (i32, i32, i32, i32) {
    %c0_i32 = arith.constant 0 : i32
    %c0_i32_0 = arith.constant 0 : i32
    %c0_i32_1 = arith.constant 0 : i32
    %c0_i32_2 = arith.constant 0 : i32
    return %arg0, %c0_i32, %c0_i32_0, %c0_i32_1 : i32, i32, i32, i32
  }
}

</mosaic_0001>

<llo_original>
// kernel: tpu_custom_call.1
$region0: #{tpu_custom_call.1}
  #allocation0 [shape = 'u32[]', space=smem, size = 0x4, offset = 0x4, fixed_abs, tag = 'smem constant byte address 0x4 - core index']
  #allocation1 [shape = 'u32[144,128]{1,0:T(1,128)}', space=vmem, size = 0x12000, scoped, tag = 'internal scratch']
  %s0 = inlined_call_operand.vmem [shape: f32[2,16,16,4], index: 0, kind: input, shape index: {}]
  %s1 = inlined_call_operand.vmem [shape: f32[4,24], index: 1, kind: input, shape index: {}]
  %s2 = inlined_call_operand.vmem [shape: f32[1,24], index: 2, kind: input, shape index: {}]
  %s3 = inlined_call_operand.vmem [shape: f32[9,24], index: 3, kind: input, shape index: {}]
  %s4 = inlined_call_operand.vmem [shape: f32[1,24], index: 4, kind: input, shape index: {}]
  %s5 = inlined_call_operand.vmem [shape: f32[24,4], index: 5, kind: input, shape index: {}]
  %s6 = inlined_call_operand.vmem [shape: f32[1,4], index: 6, kind: input, shape index: {}]
  %s7 = inlined_call_operand.vmem [shape: f32[2,16,16,4], index: 7, kind: output, shape index: {}]
  %s8 = sld [smem:[#allocation0]]
  $region61: #{tpu_custom_call.1} parent=0
    _
  %s10 = ssub.s32 1, %s8
  %s11 = scalar_select 0, %s10, %s8
  loop: start=0, step=1, limit=4
  $region2: #{tpu_custom_call.1} parent=0 // loop_pre_header
    _
  $region3: #{tpu_custom_call.1} parent=0 // loop_header
    %s13 = sphi 0, %s17
    %p14 = scmp.ge.s32.totalorder %s13, 4
    %s23 = sphi 0, %s25
    %s26 = sphi 0, %s23
    %s27 = sphi 0, %s26
    %s43 = sphi 0, %s27
    %s47 = sphi 0, %s47
    %s49 = sphi 0, %s47
    %s50 = sphi 0, %s49
    %s64 = sphi 0, %s50
    %s68 = sphi 0, %s68
    %s70 = sphi 0, %s68
    %s71 = sphi 0, %s70
    %s85 = sphi 0, %s71
    %s89 = sphi 0, %s89
    %s91 = sphi 0, %s89
    %s92 = sphi 0, %s91
    %s106 = sphi 0, %s92
    %s110 = sphi 0, %s110
    %s112 = sphi 0, %s110
    %s113 = sphi 0, %s112
    %s127 = sphi 0, %s113
    %s131 = sphi 0, %s131
    %s133 = sphi 0, %s131
    %s134 = sphi 0, %s133
    %s148 = sphi 0, %s134
    %s152 = sphi 0, %s152
    %s154 = sphi 0, %s152
    %s155 = sphi 0, %s154
    %s169 = sphi 0, %s155
    %s175 = sphi 0, %s177
    %s178 = sphi 0, %s175
    %s179 = sphi 0, %s178
    %s195 = sphi 0, %s179
  $region4: #{tpu_custom_call.1} parent=0 // loop_header_branch
    %16 = sbr.rel (%p14) target = $region8
  $region5: #{tpu_custom_call.1} parent=0 // loop_body
    %s18 = ssub.s32 %s13, 1
    %s19 = ssub.s32 %s13, 2
    %s20 = sadd.s32 %s13, 1
    %s21 = ssub.s32 %s13, %s20
    %p22 = scmp.eq.s32.totalorder %s21, 0
    %s24 = sadd.s32 %s23, 1
    %s25 = scalar_select %p22, %s23, %s24
    %p28 = pneg %p22
    %p29 = scmp.eq.s32.totalorder %s13, 1
    %p30 = por %p28, %p29
    %p31 = scmp.ne.s32.totalorder %s23, %s26
    %p32 = scmp.eq.s32.totalorder %s13, 0
    %p33 = por %p31, %p32
    %p34 = scmp.ne.s32.totalorder %s23, %s26
    %p35 = scmp.eq.s32.totalorder %s18, 1
    %p36 = por %p34, %p35
    %p37 = scmp.ne.s32.totalorder %s26, %s27
    %p38 = scmp.eq.s32.totalorder %s18, 0
    %p39 = por %p37, %p38
    %p40 = scmp.ne.s32.totalorder %s26, %s27
    %p41 = scmp.eq.s32.totalorder %s19, 1
    %p42 = por %p40, %p41
    %p44 = scmp.ne.s32.totalorder %s27, %s43
    %p45 = scmp.eq.s32.totalorder %s19, 0
    %p46 = por %p44, %p45
    %s48 = sadd.s32 %s47, 1
    %p51 = scmp.eq.s32.totalorder %s13, 1
    %p52 = scmp.ne.s32.totalorder %s47, %s49
    %p53 = scmp.eq.s32.totalorder %s13, 0
    %p54 = por %p52, %p53
    %p55 = scmp.ne.s32.totalorder %s47, %s49
    %p56 = scmp.eq.s32.totalorder %s18, 1
    %p57 = por %p55, %p56
    %p58 = scmp.ne.s32.totalorder %s49, %s50
    %p59 = scmp.eq.s32.totalorder %s18, 0
    %p60 = por %p58, %p59
    %p61 = scmp.ne.s32.totalorder %s49, %s50
    %p62 = scmp.eq.s32.totalorder %s19, 1
    %p63 = por %p61, %p62
    %p65 = scmp.ne.s32.totalorder %s50, %s64
    %p66 = scmp.eq.s32.totalorder %s19, 0
    %p67 = por %p65, %p66
    %s69 = sadd.s32 %s68, 1
    %p72 = scmp.eq.s32.totalorder %s13, 1
    %p73 = scmp.ne.s32.totalorder %s68, %s70
    %p74 = scmp.eq.s32.totalorder %s13, 0
    %p75 = por %p73, %p74
    %p76 = scmp.ne.s32.totalorder %s68, %s70
    %p77 = scmp.eq.s32.totalorder %s18, 1
    %p78 = por %p76, %p77
    %p79 = scmp.ne.s32.totalorder %s70, %s71
    %p80 = scmp.eq.s32.totalorder %s18, 0
    %p81 = por %p79, %p80
    %p82 = scmp.ne.s32.totalorder %s70, %s71
    %p83 = scmp.eq.s32.totalorder %s19, 1
    %p84 = por %p82, %p83
    %p86 = scmp.ne.s32.totalorder %s71, %s85
    %p87 = scmp.eq.s32.totalorder %s19, 0
    %p88 = por %p86, %p87
    %s90 = sadd.s32 %s89, 1
    %p93 = scmp.eq.s32.totalorder %s13, 1
    %p94 = scmp.ne.s32.totalorder %s89, %s91
    %p95 = scmp.eq.s32.totalorder %s13, 0
    %p96 = por %p94, %p95
    %p97 = scmp.ne.s32.totalorder %s89, %s91
    %p98 = scmp.eq.s32.totalorder %s18, 1
    %p99 = por %p97, %p98
    %p100 = scmp.ne.s32.totalorder %s91, %s92
    %p101 = scmp.eq.s32.totalorder %s18, 0
    %p102 = por %p100, %p101
    %p103 = scmp.ne.s32.totalorder %s91, %s92
    %p104 = scmp.eq.s32.totalorder %s19, 1
    %p105 = por %p103, %p104
    %p107 = scmp.ne.s32.totalorder %s92, %s106
    %p108 = scmp.eq.s32.totalorder %s19, 0
    %p109 = por %p107, %p108
    %s111 = sadd.s32 %s110, 1
    %p114 = scmp.eq.s32.totalorder %s13, 1
    %p115 = scmp.ne.s32.totalorder %s110, %s112
    %p116 = scmp.eq.s32.totalorder %s13, 0
    %p117 = por %p115, %p116
    %p118 = scmp.ne.s32.totalorder %s110, %s112
    %p119 = scmp.eq.s32.totalorder %s18, 1
    %p120 = por %p118, %p119
    %p121 = scmp.ne.s32.totalorder %s112, %s113
    %p122 = scmp.eq.s32.totalorder %s18, 0
    %p123 = por %p121, %p122
    %p124 = scmp.ne.s32.totalorder %s112, %s113
    %p125 = scmp.eq.s32.totalorder %s19, 1
    %p126 = por %p124, %p125
    %p128 = scmp.ne.s32.totalorder %s113, %s127
    %p129 = scmp.eq.s32.totalorder %s19, 0
    %p130 = por %p128, %p129
    %s132 = sadd.s32 %s131, 1
    %p135 = scmp.eq.s32.totalorder %s13, 1
    %p136 = scmp.ne.s32.totalorder %s131, %s133
    %p137 = scmp.eq.s32.totalorder %s13, 0
    %p138 = por %p136, %p137
    %p139 = scmp.ne.s32.totalorder %s131, %s133
    %p140 = scmp.eq.s32.totalorder %s18, 1
    %p141 = por %p139, %p140
    %p142 = scmp.ne.s32.totalorder %s133, %s134
    %p143 = scmp.eq.s32.totalorder %s18, 0
    %p144 = por %p142, %p143
    %p145 = scmp.ne.s32.totalorder %s133, %s134
    %p146 = scmp.eq.s32.totalorder %s19, 1
    %p147 = por %p145, %p146
    %p149 = scmp.ne.s32.totalorder %s134, %s148
    %p150 = scmp.eq.s32.totalorder %s19, 0
    %p151 = por %p149, %p150
    %s153 = sadd.s32 %s152, 1
    %p156 = scmp.eq.s32.totalorder %s13, 1
    %p157 = scmp.ne.s32.totalorder %s152, %s154
    %p158 = scmp.eq.s32.totalorder %s13, 0
    %p159 = por %p157, %p158
    %p160 = scmp.ne.s32.totalorder %s152, %s154
    %p161 = scmp.eq.s32.totalorder %s18, 1
    %p162 = por %p160, %p161
    %p163 = scmp.ne.s32.totalorder %s154, %s155
    %p164 = scmp.eq.s32.totalorder %s18, 0
    %p165 = por %p163, %p164
    %p166 = scmp.ne.s32.totalorder %s154, %s155
    %p167 = scmp.eq.s32.totalorder %s19, 1
    %p168 = por %p166, %p167
    %p170 = scmp.ne.s32.totalorder %s155, %s169
    %p171 = scmp.eq.s32.totalorder %s19, 0
    %p172 = por %p170, %p171
    %s173 = ssub.s32 %s13, %s20
    %p174 = scmp.eq.s32.totalorder %s173, 0
    %s176 = sadd.s32 %s175, 1
    %s177 = scalar_select %p174, %s175, %s176
    %p180 = pneg %p174
    %p181 = scmp.eq.s32.totalorder %s13, 1
    %p182 = por %p180, %p181
    %p183 = scmp.ne.s32.totalorder %s175, %s178
    %p184 = scmp.eq.s32.totalorder %s13, 0
    %p185 = por %p183, %p184
    %p186 = scmp.ne.s32.totalorder %s175, %s178
    %p187 = scmp.eq.s32.totalorder %s18, 1
    %p188 = por %p186, %p187
    %p189 = scmp.ne.s32.totalorder %s178, %s179
    %p190 = scmp.eq.s32.totalorder %s18, 0
    %p191 = por %p189, %p190
    %p192 = scmp.ne.s32.totalorder %s178, %s179
    %p193 = scmp.eq.s32.totalorder %s19, 1
    %p194 = por %p192, %p193
    %p196 = scmp.ne.s32.totalorder %s179, %s195
    %p197 = scmp.eq.s32.totalorder %s19, 0
    %p198 = por %p196, %p197
    %p199 = scmp.le.s32.totalorder 1, %s13
    %p200 = scmp.lt.s32.totalorder %s13, 3
    %p201 = pnand %p199, %p200
    %p202 = pneg %p201
    // Predicated region
    $region9: #{tpu_custom_call.1} parent=5 // pred_check
      _
    $region10: #{tpu_custom_call.1} parent=5 // pred_check_branch
      %204 = sbr.rel (%p201) target = $region12
    $region11: #{tpu_custom_call.1} parent=5 // pred_region
      %s205 = ssub.s32 %s13, 1
      // Predicated region
      $region13: #{tpu_custom_call.1} parent=11 // pred_check
        %p206 = pneg %p60
      $region14: #{tpu_custom_call.1} parent=11 // pred_check_branch
        %208 = sbr.rel (%p206) target = $region16
      $region15: #{tpu_custom_call.1} parent=11 // pred_region
        _
      $region16: #{tpu_custom_call.1} parent=11 // pred_fallthru
        _
      // Predicated region
      $region17: #{tpu_custom_call.1} parent=11 // pred_check
        %p209 = pneg %p81
      $region18: #{tpu_custom_call.1} parent=11 // pred_check_branch
        %211 = sbr.rel (%p209) target = $region20
      $region19: #{tpu_custom_call.1} parent=11 // pred_region
        _
      $region20: #{tpu_custom_call.1} parent=11 // pred_fallthru
        _
      // Predicated region
      $region21: #{tpu_custom_call.1} parent=11 // pred_check
        %p212 = pneg %p102
      $region22: #{tpu_custom_call.1} parent=11 // pred_check_branch
        %214 = sbr.rel (%p212) target = $region24
      $region23: #{tpu_custom_call.1} parent=11 // pred_region
        _
      $region24: #{tpu_custom_call.1} parent=11 // pred_fallthru
        _
      // Predicated region
      $region25: #{tpu_custom_call.1} parent=11 // pred_check
        %p215 = pneg %p123
      $region26: #{tpu_custom_call.1} parent=11 // pred_check_branch
        %217 = sbr.rel (%p215) target = $region28
      $region27: #{tpu_custom_call.1} parent=11 // pred_region
        _
      $region28: #{tpu_custom_call.1} parent=11 // pred_fallthru
        _
      // Predicated region
      $region29: #{tpu_custom_call.1} parent=11 // pred_check
        %p218 = pneg %p144
      $region30: #{tpu_custom_call.1} parent=11 // pred_check_branch
        %220 = sbr.rel (%p218) target = $region32
      $region31: #{tpu_custom_call.1} parent=11 // pred_region
        _
      $region32: #{tpu_custom_call.1} parent=11 // pred_fallthru
        _
      // Predicated region
      $region33: #{tpu_custom_call.1} parent=11 // pred_check
        %p221 = pneg %p165
      $region34: #{tpu_custom_call.1} parent=11 // pred_check_branch
        %223 = sbr.rel (%p221) target = $region36
      $region35: #{tpu_custom_call.1} parent=11 // pred_region
        _
      $region36: #{tpu_custom_call.1} parent=11 // pred_fallthru
        _
    $region12: #{tpu_custom_call.1} parent=5 // pred_fallthru
      _
    %p224 = scmp.lt.s32.totalorder %s13, 2
    // Predicated region
    $region37: #{tpu_custom_call.1} parent=5 // pred_check
      %p225 = pneg %p224
    $region38: #{tpu_custom_call.1} parent=5 // pred_check_branch
      %227 = sbr.rel (%p225) target = $region40
    $region39: #{tpu_custom_call.1} parent=5 // pred_region
      // Predicated region
      $region41: #{tpu_custom_call.1} parent=39 // pred_check
        %p228 = pneg %p33
      $region42: #{tpu_custom_call.1} parent=39 // pred_check_branch
        %230 = sbr.rel (%p228) target = $region44
      $region43: #{tpu_custom_call.1} parent=39 // pred_region
        %p231 = scmp.lt.s32.totalorder %s13, 1
        %s232 = scalar_select %p231, %s13, 1
        %s233 = smul.addr %s232, 32
        %s234 = smul.addr %s233, 8
        %s235 = scalar_lea.vmem %s0, %s234
      $region44: #{tpu_custom_call.1} parent=39 // pred_fallthru
        _
    $region40: #{tpu_custom_call.1} parent=5 // pred_fallthru
      _
    %p236 = scmp.le.s32.totalorder 1, %s13
    %p237 = scmp.lt.s32.totalorder %s13, 3
    %p238 = pnand %p236, %p237
    %p239 = pneg %p238
    // Predicated region
    $region45: #{tpu_custom_call.1} parent=5 // pred_check
      _
    $region46: #{tpu_custom_call.1} parent=5 // pred_check_branch
      %241 = sbr.rel (%p238) target = $region48
    $region47: #{tpu_custom_call.1} parent=5 // pred_region
      %s242 = ssub.s32 %s13, 1
      %p243 = scmp.lt.s32.totalorder %s18, 1
      %s244 = scalar_select %p243, %s18, 1
      %s245 = smul.addr %s244, 32
      %s246 = smul.addr %s245, 8
      %s247 = scalar_lea.vmem %s0, %s246
      %p248 = pneg %p39
      %p249 = pneg %p36
      %p250 = pneg %p60
      %p251 = pneg %p57
      %p252 = pneg %p81
      %p253 = pneg %p78
      %p254 = pneg %p102
      %p255 = pneg %p99
      %p256 = pneg %p123
      %p257 = pneg %p120
      %p258 = pneg %p144
      %p259 = pneg %p141
      %p260 = pneg %p165
      %p261 = pneg %p162
      %p262 = pneg %p191
      %p263 = pneg %p188
      %p264 = scmp.lt.s32.totalorder %s18, 1
      %s265 = scalar_select %p264, %s18, 1
      %s266 = smul.addr %s265, 32
      %s267 = smul.addr %s266, 8
      %s268 = scalar_lea.vmem %s7, %s267
      %p269 = scmp.lt.s32.totalorder %s18, 1
      %s270 = scalar_select %p269, %s18, 1
      %s271 = smul.addr %s270, 32
      %s272 = smul.addr %s271, 8
      %s273 = scalar_lea.vmem %s0, %s272
      %p274 = scmp.lt.s32.totalorder %s18, 1
      %s275 = scalar_select %p274, %s18, 1
      %s276 = smul.addr %s275, 32
      %s277 = smul.addr %s276, 8
      %s278 = scalar_lea.vmem %s7, %s277
      %v279 = vld [vmem:[%s273] sm:$0xff]
      %v280 = vld [vmem:[%s273 + $0x8] sm:$0xff]
      %v281 = vld [vmem:[%s273 + $0x10] sm:$0xff]
      %v282 = vld [vmem:[%s273 + $0x18] sm:$0xff]
      %v283 = vld [vmem:[%s273 + $0x20] sm:$0xff]
      %v284 = vld [vmem:[%s273 + $0x28] sm:$0xff]
      %v285 = vld [vmem:[%s273 + $0x30] sm:$0xff]
      %v286 = vld [vmem:[%s273 + $0x38] sm:$0xff]
      %v287 = vld [vmem:[%s273 + $0x40] sm:$0xff]
      %v288 = vld [vmem:[%s273 + $0x48] sm:$0xff]
      %v289 = vld [vmem:[%s273 + $0x50] sm:$0xff]
      %v290 = vld [vmem:[%s273 + $0x58] sm:$0xff]
      %v291 = vld [vmem:[%s273 + $0x60] sm:$0xff]
      %v292 = vld [vmem:[%s273 + $0x68] sm:$0xff]
      %v293 = vld [vmem:[%s273 + $0x70] sm:$0xff]
      %v294 = vld [vmem:[%s273 + $0x78] sm:$0xff]
      %v295 = vld [vmem:[%s273 + $0x80] sm:$0xff]
      %v296 = vld [vmem:[%s273 + $0x88] sm:$0xff]
      %v297 = vld [vmem:[%s273 + $0x90] sm:$0xff]
      %v298 = vld [vmem:[%s273 + $0x98] sm:$0xff]
      %v299 = vld [vmem:[%s273 + $0xa0] sm:$0xff]
      %v300 = vld [vmem:[%s273 + $0xa8] sm:$0xff]
      %v301 = vld [vmem:[%s273 + $0xb0] sm:$0xff]
      %v302 = vld [vmem:[%s273 + $0xb8] sm:$0xff]
      %v303 = vld [vmem:[%s273 + $0xc0] sm:$0xff]
      %v304 = vld [vmem:[%s273 + $0xc8] sm:$0xff]
      %v305 = vld [vmem:[%s273 + $0xd0] sm:$0xff]
      %v306 = vld [vmem:[%s273 + $0xd8] sm:$0xff]
      %v307 = vld [vmem:[%s273 + $0xe0] sm:$0xff]
      %v308 = vld [vmem:[%s273 + $0xe8] sm:$0xff]
      %v309 = vld [vmem:[%s273 + $0xf0] sm:$0xff]
      %v310 = vld [vmem:[%s273 + $0xf8] sm:$0xff]
      %v311 = vld [vmem:[%s1] sm:$0xf]
      %v312 = vld [vmem:[%s2] sm:$0x1]
      %v314 = vlaneseq
      %v315 = vshrl.u32 %v314, 7
      %v316 = vsub.s32 0, %v315
      %v317 = vrot.slane %v312, %v316
      %vm319 = vcmask 31744
      %v321 = vsel %vm319, %v279, 0
      %v324 = vsel %vm319, %v280, 0
      %v327 = vsel %vm319, %v281, 0
      %v330 = vsel %vm319, %v282, 0
      %v333 = vsel %vm319, %v283, 0
      %v336 = vsel %vm319, %v284, 0
      %v339 = vsel %vm319, %v285, 0
      %v342 = vsel %vm319, %v286, 0
      %v345 = vsel %vm319, %v287, 0
      %v348 = vsel %vm319, %v288, 0
      %v351 = vsel %vm319, %v289, 0
      %v354 = vsel %vm319, %v290, 0
      %v357 = vsel %vm319, %v291, 0
      %v360 = vsel %vm319, %v292, 0
      %v363 = vsel %vm319, %v293, 0
      %v366 = vsel %vm319, %v294, 0
      %v369 = vsel %vm319, %v295, 0
      %v372 = vsel %vm319, %v296, 0
      %v375 = vsel %vm319, %v297, 0
      %v378 = vsel %vm319, %v298, 0
      %v381 = vsel %vm319, %v299, 0
      %v384 = vsel %vm319, %v300, 0
      %v387 = vsel %vm319, %v301, 0
      %v390 = vsel %vm319, %v302, 0
      %v393 = vsel %vm319, %v303, 0
      %v396 = vsel %vm319, %v304, 0
      %v399 = vsel %vm319, %v305, 0
      %v402 = vsel %vm319, %v306, 0
      %v405 = vsel %vm319, %v307, 0
      %v408 = vsel %vm319, %v308, 0
      %v411 = vsel %vm319, %v309, 0
      %v414 = vsel %vm319, %v310, 0
      %vm416 = vcmask 1043456
      %v418 = vsel %vm416, %v311, 0
      %420 = vmatprep.subr.mxu0 0.0
      %421 = vmatpush1.msra.mxu0 %v418
      %422 = vmatprep.subr.mxu0 0.0
      %423 = vmatpush1.msra.mxu0 0.0
      %424 = vmatprep.subr.mxu0 0.0
      %425 = vmatpush1.msra.mxu0 0.0
      %426 = vmatprep.subr.mxu0 0.0
      %427 = vmatpush1.msra.mxu0 0.0
      %428 = vmatprep.subr.mxu0 0.0
      %429 = vmatpush1.msra.mxu0 0.0
      %430 = vmatprep.subr.mxu0 0.0
      %431 = vmatpush1.msra.mxu0 0.0
      %432 = vmatprep.subr.mxu0 0.0
      %433 = vmatpush1.msra.mxu0 0.0
      %434 = vmatprep.subr.mxu0 0.0
      %435 = vmatpush1.msra.mxu0 0.0
      %436 = vmatprep.subr.mxu0 0.0
      %437 = vmatpush1.msra.mxu0 0.0
      %438 = vmatprep.subr.mxu0 0.0
      %439 = vmatpush1.msra.mxu0 0.0
      %440 = vmatprep.subr.mxu0 0.0
      %441 = vmatpush1.msra.mxu0 0.0
      %442 = vmatprep.subr.mxu0 0.0
      %443 = vmatpush1.msra.mxu0 0.0
      %444 = vmatprep.subr.mxu0 0.0
      %445 = vmatpush1.msra.mxu0 0.0
      %446 = vmatprep.subr.mxu0 0.0
      %447 = vmatpush1.msra.mxu0 0.0
      %448 = vmatprep.subr.mxu0 0.0
      %449 = vmatpush1.msra.mxu0 0.0
      %450 = vmatprep.subr.mxu0 0.0
      %451 = vmatpush1.msra.mxu0 0.0
      %452 = vmatprep.subr.mxu0 0.0
      %453 = vmatpush1.msra.mxu0 0.0
      %454 = vmatprep.subr.mxu0 0.0
      %455 = vmatpush1.msra.mxu0 0.0
      %456 = vmatprep.subr.mxu0 0.0
      %457 = vmatpush1.msra.mxu0 0.0
      %458 = vmatprep.subr.mxu0 0.0
      %459 = vmatpush1.msra.mxu0 0.0
      %460 = vmatprep.subr.mxu0 0.0
      %461 = vmatpush1.msra.mxu0 0.0
      %462 = vmatprep.subr.mxu0 0.0
      %463 = vmatpush1.msra.mxu0 0.0
      %464 = vmatprep.subr.mxu0 0.0
      %465 = vmatpush1.msra.mxu0 0.0
      %466 = vmatprep.subr.mxu0 0.0
      %467 = vmatpush1.msra.mxu0 0.0
      %468 = vmatprep.subr.mxu0 0.0
      %469 = vmatpush1.msra.mxu0 0.0
      %470 = vmatprep.subr.mxu0 0.0
      %471 = vmatpush1.msra.mxu0 0.0
      %472 = vmatprep.subr.mxu0 0.0
      %473 = vmatpush1.msra.mxu0 0.0
      %474 = vmatprep.subr.mxu0 0.0
      %475 = vmatpush1.msra.mxu0 0.0
      %476 = vmatprep.subr.mxu0 0.0
      %477 = vmatpush1.msra.mxu0 0.0
      %478 = vmatprep.subr.mxu0 0.0
      %479 = vmatpush1.msra.mxu0 0.0
      %480 = vmatprep.subr.mxu0 0.0
      %481 = vmatpush1.msra.mxu0 0.0
      %482 = vmatprep.subr.mxu0 0.0
      %483 = vmatpush1.msra.mxu0 0.0
      %484 = vmatprep.mubr.f32.mxu0 0.0
      %485 = vmatmul.mubr.f32.gmra.mrb[0].mxu0 %v321
      %v486 = vpop.f32.mrb[0].mxu0
      %v487 = vadd.f32 %v317, %v486
      %v488 = vpop.f32.mrb[0].mxu0
      %489 = vmatprep.mubr.f32.mxu0 0.0
      %490 = vmatmul.mubr.f32.gmra.mrb[0].mxu0 %v324
      %v491 = vpop.f32.mrb[0].mxu0
      %v492 = vadd.f32 %v317, %v491
      %v493 = vpop.f32.mrb[0].mxu0
      %494 = vmatprep.mubr.f32.mxu0 0.0
      %495 = vmatmul.mubr.f32.gmra.mrb[0].mxu0 %v327
      %v496 = vpop.f32.mrb[0].mxu0
      %v497 = vadd.f32 %v317, %v496
      %v498 = vpop.f32.mrb[0].mxu0
      %499 = vmatprep.mubr.f32.mxu0 0.0
      %500 = vmatmul.mubr.f32.gmra.mrb[0].mxu0 %v330
      %v501 = vpop.f32.mrb[0].mxu0
      %v502 = vadd.f32 %v317, %v501
      %v503 = vpop.f32.mrb[0].mxu0
      %504 = vmatprep.mubr.f32.mxu0 0.0
      %505 = vmatmul.mubr.f32.gmra.mrb[0].mxu0 %v333
      %v506 = vpop.f32.mrb[0].mxu0
      %v507 = vadd.f32 %v317, %v506
      %v508 = vpop.f32.mrb[0].mxu0
      %509 = vmatprep.mubr.f32.mxu0 0.0
      %510 = vmatmul.mubr.f32.gmra.mrb[0].mxu0 %v336
      %v511 = vpop.f32.mrb[0].mxu0
      %v512 = vadd.f32 %v317, %v511
      %v513 = vpop.f32.mrb[0].mxu0
      %514 = vmatprep.mubr.f32.mxu0 0.0
      %515 = vmatmul.mubr.f32.gmra.mrb[0].mxu0 %v339
      %v516 = vpop.f32.mrb[0].mxu0
      %v517 = vadd.f32 %v317, %v516
      %v518 = vpop.f32.mrb[0].mxu0
      %519 = vmatprep.mubr.f32.mxu0 0.0
      %520 = vmatmul.mubr.f32.gmra.mrb[0].mxu0 %v342
      %v521 = vpop.f32.mrb[0].mxu0
      %v522 = vadd.f32 %v317, %v521
      %v523 = vpop.f32.mrb[0].mxu0
      %524 = vmatprep.mubr.f32.mxu0 0.0
      %525 = vmatmul.mubr.f32.gmra.mrb[0].mxu0 %v345
      %v526 = vpop.f32.mrb[0].mxu0
      %v527 = vadd.f32 %v317, %v526
      %v528 = vpop.f32.mrb[0].mxu0
      %529 = vmatprep.mubr.f32.mxu0 0.0
      %530 = vmatmul.mubr.f32.gmra.mrb[0].mxu0 %v348
      %v531 = vpop.f32.mrb[0].mxu0
      %v532 = vadd.f32 %v317, %v531
      %v533 = vpop.f32.mrb[0].mxu0
      %534 = vmatprep.mubr.f32.mxu0 0.0
      %535 = vmatmul.mubr.f32.gmra.mrb[0].mxu0 %v351
      %v536 = vpop.f32.mrb[0].mxu0
      %v537 = vadd.f32 %v317, %v536
      %v538 = vpop.f32.mrb[0].mxu0
      %539 = vmatprep.mubr.f32.mxu0 0.0
      %540 = vmatmul.mubr.f32.gmra.mrb[0].mxu0 %v354
      %v541 = vpop.f32.mrb[0].mxu0
      %v542 = vadd.f32 %v317, %v541
      %v543 = vpop.f32.mrb[0].mxu0
      %544 = vmatprep.mubr.f32.mxu0 0.0
      %545 = vmatmul.mubr.f32.gmra.mrb[0].mxu0 %v357
      %v546 = vpop.f32.mrb[0].mxu0
      %v547 = vadd.f32 %v317, %v546
      %v548 = vpop.f32.mrb[0].mxu0
      %549 = vmatprep.mubr.f32.mxu0 0.0
      %550 = vmatmul.mubr.f32.gmra.mrb[0].mxu0 %v360
      %v551 = vpop.f32.mrb[0].mxu0
      %v552 = vadd.f32 %v317, %v551
      %v553 = vpop.f32.mrb[0].mxu0
      %554 = vmatprep.mubr.f32.mxu0 0.0
      %555 = vmatmul.mubr.f32.gmra.mrb[0].mxu0 %v363
      %v556 = vpop.f32.mrb[0].mxu0
      %v557 = vadd.f32 %v317, %v556
      %v558 = vpop.f32.mrb[0].mxu0
      %559 = vmatprep.mubr.f32.mxu0 0.0
      %560 = vmatmul.mubr.f32.gmra.mrb[0].mxu0 %v366
      %v561 = vpop.f32.mrb[0].mxu0
      %v562 = vadd.f32 %v317, %v561
      %v563 = vpop.f32.mrb[0].mxu0
      %564 = vmatprep.mubr.f32.mxu0 0.0
      %565 = vmatmul.mubr.f32.gmra.mrb[0].mxu0 %v369
      %v566 = vpop.f32.mrb[0].mxu0
      %v567 = vadd.f32 %v317, %v566
      %v568 = vpop.f32.mrb[0].mxu0
      %569 = vmatprep.mubr.f32.mxu0 0.0
      %570 = vmatmul.mubr.f32.gmra.mrb[0].mxu0 %v372
      %v571 = vpop.f32.mrb[0].mxu0
      %v572 = vadd.f32 %v317, %v571
      %v573 = vpop.f32.mrb[0].mxu0
      %574 = vmatprep.mubr.f32.mxu0 0.0
      %575 = vmatmul.mubr.f32.gmra.mrb[0].mxu0 %v375
      %v576 = vpop.f32.mrb[0].mxu0
      %v577 = vadd.f32 %v317, %v576
      %v578 = vpop.f32.mrb[0].mxu0
      %579 = vmatprep.mubr.f32.mxu0 0.0
      %580 = vmatmul.mubr.f32.gmra.mrb[0].mxu0 %v378
      %v581 = vpop.f32.mrb[0].mxu0
      %v582 = vadd.f32 %v317, %v581
      %v583 = vpop.f32.mrb[0].mxu0
      %584 = vmatprep.mubr.f32.mxu0 0.0
      %585 = vmatmul.mubr.f32.gmra.mrb[0].mxu0 %v381
      %v586 = vpop.f32.mrb[0].mxu0
      %v587 = vadd.f32 %v317, %v586
      %v588 = vpop.f32.mrb[0].mxu0
      %589 = vmatprep.mubr.f32.mxu0 0.0
      %590 = vmatmul.mubr.f32.gmra.mrb[0].mxu0 %v384
      %v591 = vpop.f32.mrb[0].mxu0
      %v592 = vadd.f32 %v317, %v591
      %v593 = vpop.f32.mrb[0].mxu0
      %594 = vmatprep.mubr.f32.mxu0 0.0
      %595 = vmatmul.mubr.f32.gmra.mrb[0].mxu0 %v387
      %v596 = vpop.f32.mrb[0].mxu0
      %v597 = vadd.f32 %v317, %v596
      %v598 = vpop.f32.mrb[0].mxu0
      %599 = vmatprep.mubr.f32.mxu0 0.0
      %600 = vmatmul.mubr.f32.gmra.mrb[0].mxu0 %v390
      %v601 = vpop.f32.mrb[0].mxu0
      %v602 = vadd.f32 %v317, %v601
      %v603 = vpop.f32.mrb[0].mxu0
      %604 = vmatprep.mubr.f32.mxu0 0.0
      %605 = vmatmul.mubr.f32.gmra.mrb[0].mxu0 %v393
      %v606 = vpop.f32.mrb[0].mxu0
      %v607 = vadd.f32 %v317, %v606
      %v608 = vpop.f32.mrb[0].mxu0
      %609 = vmatprep.mubr.f32.mxu0 0.0
      %610 = vmatmul.mubr.f32.gmra.mrb[0].mxu0 %v396
      %v611 = vpop.f32.mrb[0].mxu0
      %v612 = vadd.f32 %v317, %v611
      %v613 = vpop.f32.mrb[0].mxu0
      %614 = vmatprep.mubr.f32.mxu0 0.0
      %615 = vmatmul.mubr.f32.gmra.mrb[0].mxu0 %v399
      %v616 = vpop.f32.mrb[0].mxu0
      %v617 = vadd.f32 %v317, %v616
      %v618 = vpop.f32.mrb[0].mxu0
      %619 = vmatprep.mubr.f32.mxu0 0.0
      %620 = vmatmul.mubr.f32.gmra.mrb[0].mxu0 %v402
      %v621 = vpop.f32.mrb[0].mxu0
      %v622 = vadd.f32 %v317, %v621
      %v623 = vpop.f32.mrb[0].mxu0
      %624 = vmatprep.mubr.f32.mxu0 0.0
      %625 = vmatmul.mubr.f32.gmra.mrb[0].mxu0 %v405
      %v626 = vpop.f32.mrb[0].mxu0
      %v627 = vadd.f32 %v317, %v626
      %v628 = vpop.f32.mrb[0].mxu0
      %629 = vmatprep.mubr.f32.mxu0 0.0
      %630 = vmatmul.mubr.f32.gmra.mrb[0].mxu0 %v408
      %v631 = vpop.f32.mrb[0].mxu0
      %v632 = vadd.f32 %v317, %v631
      %v633 = vpop.f32.mrb[0].mxu0
      %634 = vmatprep.mubr.f32.mxu0 0.0
      %635 = vmatmul.mubr.f32.gmra.mrb[0].mxu0 %v411
      %v636 = vpop.f32.mrb[0].mxu0
      %v637 = vadd.f32 %v317, %v636
      %v638 = vpop.f32.mrb[0].mxu0
      %639 = vmatprep.mubr.f32.mxu0 0.0
      %640 = vmatmul.mubr.f32.gmra.mrb[0].mxu0 %v414
      %v641 = vpop.f32.mrb[0].mxu0
      %v642 = vadd.f32 %v317, %v641
      %v643 = vpop.f32.mrb[0].mxu0
      %644 = vdwg.mxu0
      %v645 = vmax.f32 %v487, 0.0
      %v646 = vmax.f32 %v492, 0.0
      %v647 = vmax.f32 %v497, 0.0
      %v648 = vmax.f32 %v502, 0.0
      %v649 = vmax.f32 %v507, 0.0
      %v650 = vmax.f32 %v512, 0.0
      %v651 = vmax.f32 %v517, 0.0
      %v652 = vmax.f32 %v522, 0.0
      %v653 = vmax.f32 %v527, 0.0
      %v654 = vmax.f32 %v532, 0.0
      %v655 = vmax.f32 %v537, 0.0
      %v656 = vmax.f32 %v542, 0.0
      %v657 = vmax.f32 %v547, 0.0
      %v658 = vmax.f32 %v552, 0.0
      %v659 = vmax.f32 %v557, 0.0
      %v660 = vmax.f32 %v562, 0.0
      %v661 = vmax.f32 %v567, 0.0
      %v662 = vmax.f32 %v572, 0.0
      %v663 = vmax.f32 %v577, 0.0
      %v664 = vmax.f32 %v582, 0.0
      %v665 = vmax.f32 %v587, 0.0
      %v666 = vmax.f32 %v592, 0.0
      %v667 = vmax.f32 %v597, 0.0
      %v668 = vmax.f32 %v602, 0.0
      %v669 = vmax.f32 %v607, 0.0
      %v670 = vmax.f32 %v612, 0.0
      %v671 = vmax.f32 %v617, 0.0
      %v672 = vmax.f32 %v622, 0.0
      %v673 = vmax.f32 %v627, 0.0
      %v674 = vmax.f32 %v632, 0.0
      %v675 = vmax.f32 %v637, 0.0
      %v676 = vmax.f32 %v642, 0.0
      %v677 = vmin.f32 %v645, 6.0
      %v678 = vmin.f32 %v646, 6.0
      %v679 = vmin.f32 %v647, 6.0
      %v680 = vmin.f32 %v648, 6.0
      %v681 = vmin.f32 %v649, 6.0
      %v682 = vmin.f32 %v650, 6.0
      %v683 = vmin.f32 %v651, 6.0
      %v684 = vmin.f32 %v652, 6.0
      %v685 = vmin.f32 %v653, 6.0
      %v686 = vmin.f32 %v654, 6.0
      %v687 = vmin.f32 %v655, 6.0
      %v688 = vmin.f32 %v656, 6.0
      %v689 = vmin.f32 %v657, 6.0
      %v690 = vmin.f32 %v658, 6.0
      %v691 = vmin.f32 %v659, 6.0
      %v692 = vmin.f32 %v660, 6.0
      %v693 = vmin.f32 %v661, 6.0
      %v694 = vmin.f32 %v662, 6.0
      %v695 = vmin.f32 %v663, 6.0
      %v696 = vmin.f32 %v664, 6.0
      %v697 = vmin.f32 %v665, 6.0
      %v698 = vmin.f32 %v666, 6.0
      %v699 = vmin.f32 %v667, 6.0
      %v700 = vmin.f32 %v668, 6.0
      %v701 = vmin.f32 %v669, 6.0
      %v702 = vmin.f32 %v670, 6.0
      %v703 = vmin.f32 %v671, 6.0
      %v704 = vmin.f32 %v672, 6.0
      %v705 = vmin.f32 %v673, 6.0
      %v706 = vmin.f32 %v674, 6.0
      %v707 = vmin.f32 %v675, 6.0
      %v708 = vmin.f32 %v676, 6.0
      %vm742 = vcmask 1040384
      %v743 = vrot.slane 0.0, 7
      %v744 = vsel %vm742, %v743, %v743
      %v745 = vrot.slane %v677, 7
      %v746 = vrot.slane %v678, 7
      %v747 = vsel %vm742, %v745, %v746
      %v748 = vrot.slane %v679, 7
      %v749 = vrot.slane %v680, 7
      %v750 = vsel %vm742, %v748, %v749
      %v751 = vrot.slane %v681, 7
      %v752 = vrot.slane %v682, 7
      %v753 = vsel %vm742, %v751, %v752
      %v754 = vrot.slane %v683, 7
      %v755 = vrot.slane %v684, 7
      %v756 = vsel %vm742, %v754, %v755
      %v757 = vrot.slane %v685, 7
      %v758 = vrot.slane %v686, 7
      %v759 = vsel %vm742, %v757, %v758
      %v760 = vrot.slane %v687, 7
      %v761 = vrot.slane %v688, 7
      %v762 = vsel %vm742, %v760, %v761
      %v763 = vrot.slane %v689, 7
      %v764 = vrot.slane %v690, 7
      %v765 = vsel %vm742, %v763, %v764
      %v766 = vrot.slane %v691, 7
      %v767 = vrot.slane %v692, 7
      %v768 = vsel %vm742, %v766, %v767
      %v769 = vrot.slane %v693, 7
      %v770 = vrot.slane %v694, 7
      %v771 = vsel %vm742, %v769, %v770
      %v772 = vrot.slane %v695, 7
      %v773 = vrot.slane %v696, 7
      %v774 = vsel %vm742, %v772, %v773
      %v775 = vrot.slane %v697, 7
      %v776 = vrot.slane %v698, 7
      %v777 = vsel %vm742, %v775, %v776
      %v778 = vrot.slane %v699, 7
      %v779 = vrot.slane %v700, 7
      %v780 = vsel %vm742, %v778, %v779
      %v781 = vrot.slane %v701, 7
      %v782 = vrot.slane %v702, 7
      %v783 = vsel %vm742, %v781, %v782
      %v784 = vrot.slane %v703, 7
      %v785 = vrot.slane %v704, 7
      %v786 = vsel %vm742, %v784, %v785
      %v787 = vrot.slane %v705, 7
      %v788 = vrot.slane %v706, 7
      %v789 = vsel %vm742, %v787, %v788
      %v790 = vrot.slane %v707, 7
      %v791 = vrot.slane %v708, 7
      %v792 = vsel %vm742, %v790, %v791
      %v843 = vsel %vm742, 0.0, %v743
      %v844 = vsel %vm742, 0.0, %v745
      %v845 = vsel %vm742, 0.0, %v748
      %v846 = vsel %vm742, 0.0, %v751
      %v847 = vsel %vm742, 0.0, %v754
      %v848 = vsel %vm742, 0.0, %v757
      %v849 = vsel %vm742, 0.0, %v760
      %v850 = vsel %vm742, 0.0, %v763
      %v851 = vsel %vm742, 0.0, %v766
      %v852 = vsel %vm742, 0.0, %v769
      %v853 = vsel %vm742, 0.0, %v772
      %v854 = vsel %vm742, 0.0, %v775
      %v855 = vsel %vm742, 0.0, %v778
      %v856 = vsel %vm742, 0.0, %v781
      %v857 = vsel %vm742, 0.0, %v784
      %v858 = vsel %vm742, 0.0, %v787
      %v859 = vsel %vm742, 0.0, %v790
      %v860 = vsel %vm742, %v743, 0.0
      %v861 = vsel %vm742, %v746, 0.0
      %v862 = vsel %vm742, %v749, 0.0
      %v863 = vsel %vm742, %v752, 0.0
      %v864 = vsel %vm742, %v755, 0.0
      %v865 = vsel %vm742, %v758, 0.0
      %v866 = vsel %vm742, %v761, 0.0
      %v867 = vsel %vm742, %v764, 0.0
      %v868 = vsel %vm742, %v767, 0.0
      %v869 = vsel %vm742, %v770, 0.0
      %v870 = vsel %vm742, %v773, 0.0
      %v871 = vsel %vm742, %v776, 0.0
      %v872 = vsel %vm742, %v779, 0.0
      %v873 = vsel %vm742, %v782, 0.0
      %v874 = vsel %vm742, %v785, 0.0
      %v875 = vsel %vm742, %v788, 0.0
      %v876 = vsel %vm742, %v791, 0.0
      %v877 = vld [vmem:[%s3] sm:$0xff]
      %v878 = vld [vmem:[%s3 + $0x8] sm:$0x1]
      %v879 = vlaneseq
      %v880 = vshrl.u32 %v879, 7
      %v881 = vsub.s32 0, %v880
      %v882 = vrot.slane %v877, %v881
      %v883 = vmul.f32 %v843, %v882
      %v884 = vmul.f32 %v744, %v882
      %v885 = vmul.f32 %v844, %v882
      %v886 = vmul.f32 %v747, %v882
      %v887 = vmul.f32 %v845, %v882
      %v888 = vmul.f32 %v750, %v882
      %v889 = vmul.f32 %v846, %v882
      %v890 = vmul.f32 %v753, %v882
      %v891 = vmul.f32 %v847, %v882
      %v892 = vmul.f32 %v756, %v882
      %v893 = vmul.f32 %v848, %v882
      %v894 = vmul.f32 %v759, %v882
      %v895 = vmul.f32 %v849, %v882
      %v896 = vmul.f32 %v762, %v882
      %v897 = vmul.f32 %v850, %v882
      %v898 = vmul.f32 %v765, %v882
      %v899 = vmul.f32 %v851, %v882
      %v900 = vmul.f32 %v768, %v882
      %v901 = vmul.f32 %v852, %v882
      %v902 = vmul.f32 %v771, %v882
      %v903 = vmul.f32 %v853, %v882
      %v904 = vmul.f32 %v774, %v882
      %v905 = vmul.f32 %v854, %v882
      %v906 = vmul.f32 %v777, %v882
      %v907 = vmul.f32 %v855, %v882
      %v908 = vmul.f32 %v780, %v882
      %v909 = vmul.f32 %v856, %v882
      %v910 = vmul.f32 %v783, %v882
      %v911 = vmul.f32 %v857, %v882
      %v912 = vmul.f32 %v786, %v882
      %v913 = vmul.f32 %v858, %v882
      %v914 = vmul.f32 %v789, %v882
      %v915 = vlaneseq
      %v916 = vshrl.u32 %v915, 7
      %v917 = vsub.s32 1, %v916
      %v918 = vrot.slane %v877, %v917
      %v919 = vmul.f32 %v843, %v918
      %v920 = vmul.f32 %v744, %v918
      %v921 = vmul.f32 %v860, %v918
      %v922 = vmul.f32 %v844, %v918
      %v923 = vmul.f32 %v747, %v918
      %v924 = vmul.f32 %v861, %v918
      %v925 = vmul.f32 %v845, %v918
      %v926 = vmul.f32 %v750, %v918
      %v927 = vmul.f32 %v862, %v918
      %v928 = vmul.f32 %v846, %v918
      %v929 = vmul.f32 %v753, %v918
      %v930 = vmul.f32 %v863, %v918
      %v931 = vmul.f32 %v847, %v918
      %v932 = vmul.f32 %v756, %v918
      %v933 = vmul.f32 %v864, %v918
      %v934 = vmul.f32 %v848, %v918
      %v935 = vmul.f32 %v759, %v918
      %v936 = vmul.f32 %v865, %v918
      %v937 = vmul.f32 %v849, %v918
      %v938 = vmul.f32 %v762, %v918
      %v939 = vmul.f32 %v866, %v918
      %v940 = vmul.f32 %v850, %v918
      %v941 = vmul.f32 %v765, %v918
      %v942 = vmul.f32 %v867, %v918
      %v943 = vmul.f32 %v851, %v918
      %v944 = vmul.f32 %v768, %v918
      %v945 = vmul.f32 %v868, %v918
      %v946 = vmul.f32 %v852, %v918
      %v947 = vmul.f32 %v771, %v918
      %v948 = vmul.f32 %v869, %v918
      %v949 = vmul.f32 %v853, %v918
      %v950 = vmul.f32 %v774, %v918
      %v951 = vmul.f32 %v870, %v918
      %v952 = vmul.f32 %v854, %v918
      %v953 = vmul.f32 %v777, %v918
      %v954 = vmul.f32 %v871, %v918
      %v955 = vmul.f32 %v855, %v918
      %v956 = vmul.f32 %v780, %v918
      %v957 = vmul.f32 %v872, %v918
      %v958 = vmul.f32 %v856, %v918
      %v959 = vmul.f32 %v783, %v918
      %v960 = vmul.f32 %v873, %v918
      %v961 = vmul.f32 %v857, %v918
      %v962 = vmul.f32 %v786, %v918
      %v963 = vmul.f32 %v874, %v918
      %v964 = vmul.f32 %v858, %v918
      %v965 = vmul.f32 %v789, %v918
      %v966 = vmul.f32 %v875, %v918
      %vm1015 = vcmask 1046528
      %v1016 = vrot.slane %v919, 1
      %v1017 = vrot.slane %v920, 1
      %v1018 = vsel %vm1015, %v1016, %v1017
      %v1019 = vrot.slane %v921, 1
      %v1020 = vsel %vm1015, %v1017, %v1019
      %v1021 = vrot.slane %v922, 1
      %v1022 = vrot.slane %v923, 1
      %v1023 = vsel %vm1015, %v1021, %v1022
      %v1024 = vrot.slane %v924, 1
      %v1025 = vsel %vm1015, %v1022, %v1024
      %v1026 = vrot.slane %v925, 1
      %v1027 = vrot.slane %v926, 1
      %v1028 = vsel %vm1015, %v1026, %v1027
      %v1029 = vrot.slane %v927, 1
      %v1030 = vsel %vm1015, %v1027, %v1029
      %v1031 = vrot.slane %v928, 1
      %v1032 = vrot.slane %v929, 1
      %v1033 = vsel %vm1015, %v1031, %v1032
      %v1034 = vrot.slane %v930, 1
      %v1035 = vsel %vm1015, %v1032, %v1034
      %v1036 = vrot.slane %v931, 1
      %v1037 = vrot.slane %v932, 1
      %v1038 = vsel %vm1015, %v1036, %v1037
      %v1039 = vrot.slane %v933, 1
      %v1040 = vsel %vm1015, %v1037, %v1039
      %v1041 = vrot.slane %v934, 1
      %v1042 = vrot.slane %v935, 1
      %v1043 = vsel %vm1015, %v1041, %v1042
      %v1044 = vrot.slane %v936, 1
      %v1045 = vsel %vm1015, %v1042, %v1044
      %v1046 = vrot.slane %v937, 1
      %v1047 = vrot.slane %v938, 1
      %v1048 = vsel %vm1015, %v1046, %v1047
      %v1049 = vrot.slane %v939, 1
      %v1050 = vsel %vm1015, %v1047, %v1049
      %v1051 = vrot.slane %v940, 1
      %v1052 = vrot.slane %v941, 1
      %v1053 = vsel %vm1015, %v1051, %v1052
      %v1054 = vrot.slane %v942, 1
      %v1055 = vsel %vm1015, %v1052, %v1054
      %v1056 = vrot.slane %v943, 1
      %v1057 = vrot.slane %v944, 1
      %v1058 = vsel %vm1015, %v1056, %v1057
      %v1059 = vrot.slane %v945, 1
      %v1060 = vsel %vm1015, %v1057, %v1059
      %v1061 = vrot.slane %v946, 1
      %v1062 = vrot.slane %v947, 1
      %v1063 = vsel %vm1015, %v1061, %v1062
      %v1064 = vrot.slane %v948, 1
      %v1065 = vsel %vm1015, %v1062, %v1064
      %v1066 = vrot.slane %v949, 1
      %v1067 = vrot.slane %v950, 1
      %v1068 = vsel %vm1015, %v1066, %v1067
      %v1069 = vrot.slane %v951, 1
      %v1070 = vsel %vm1015, %v1067, %v1069
      %v1071 = vrot.slane %v952, 1
      %v1072 = vrot.slane %v953, 1
      %v1073 = vsel %vm1015, %v1071, %v1072
      %v1074 = vrot.slane %v954, 1
      %v1075 = vsel %vm1015, %v1072, %v1074
      %v1076 = vrot.slane %v955, 1
      %v1077 = vrot.slane %v956, 1
      %v1078 = vsel %vm1015, %v1076, %v1077
      %v1079 = vrot.slane %v957, 1
      %v1080 = vsel %vm1015, %v1077, %v1079
      %v1081 = vrot.slane %v958, 1
      %v1082 = vrot.slane %v959, 1
      %v1083 = vsel %vm1015, %v1081, %v1082
      %v1084 = vrot.slane %v960, 1
      %v1085 = vsel %vm1015, %v1082, %v1084
      %v1086 = vrot.slane %v961, 1
      %v1087 = vrot.slane %v962, 1
      %v1088 = vsel %vm1015, %v1086, %v1087
      %v1089 = vrot.slane %v963, 1
      %v1090 = vsel %vm1015, %v1087, %v1089
      %v1091 = vrot.slane %v964, 1
      %v1092 = vrot.slane %v965, 1
      %v1093 = vsel %vm1015, %v1091, %v1092
      %v1094 = vrot.slane %v966, 1
      %v1095 = vsel %vm1015, %v1092, %v1094
      %v1128 = vadd.f32 %v883, %v1018
      %v1129 = vadd.f32 %v884, %v1020
      %v1130 = vadd.f32 %v885, %v1023
      %v1131 = vadd.f32 %v886, %v1025
      %v1132 = vadd.f32 %v887, %v1028
      %v1133 = vadd.f32 %v888, %v1030
      %v1134 = vadd.f32 %v889, %v1033
      %v1135 = vadd.f32 %v890, %v1035
      %v1136 = vadd.f32 %v891, %v1038
      %v1137 = vadd.f32 %v892, %v1040
      %v1138 = vadd.f32 %v893, %v1043
      %v1139 = vadd.f32 %v894, %v1045
      %v1140 = vadd.f32 %v895, %v1048
      %v1141 = vadd.f32 %v896, %v1050
      %v1142 = vadd.f32 %v897, %v1053
      %v1143 = vadd.f32 %v898, %v1055
      %v1144 = vadd.f32 %v899, %v1058
      %v1145 = vadd.f32 %v900, %v1060
      %v1146 = vadd.f32 %v901, %v1063
      %v1147 = vadd.f32 %v902, %v1065
      %v1148 = vadd.f32 %v903, %v1068
      %v1149 = vadd.f32 %v904, %v1070
      %v1150 = vadd.f32 %v905, %v1073
      %v1151 = vadd.f32 %v906, %v1075
      %v1152 = vadd.f32 %v907, %v1078
      %v1153 = vadd.f32 %v908, %v1080
      %v1154 = vadd.f32 %v909, %v1083
      %v1155 = vadd.f32 %v910, %v1085
      %v1156 = vadd.f32 %v911, %v1088
      %v1157 = vadd.f32 %v912, %v1090
      %v1158 = vadd.f32 %v913, %v1093
      %v1159 = vadd.f32 %v914, %v1095
      %v1160 = vlaneseq
      %v1161 = vshrl.u32 %v1160, 7
      %v1162 = vsub.s32 2, %v1161
      %v1163 = vrot.slane %v877, %v1162
      %v1164 = vmul.f32 %v843, %v1163
      %v1165 = vmul.f32 %v744, %v1163
      %v1166 = vmul.f32 %v860, %v1163
      %v1167 = vmul.f32 %v844, %v1163
      %v1168 = vmul.f32 %v747, %v1163
      %v1169 = vmul.f32 %v861, %v1163
      %v1170 = vmul.f32 %v845, %v1163
      %v1171 = vmul.f32 %v750, %v1163
      %v1172 = vmul.f32 %v862, %v1163
      %v1173 = vmul.f32 %v846, %v1163
      %v1174 = vmul.f32 %v753, %v1163
      %v1175 = vmul.f32 %v863, %v1163
      %v1176 = vmul.f32 %v847, %v1163
      %v1177 = vmul.f32 %v756, %v1163
      %v1178 = vmul.f32 %v864, %v1163
      %v1179 = vmul.f32 %v848, %v1163
      %v1180 = vmul.f32 %v759, %v1163
      %v1181 = vmul.f32 %v865, %v1163
      %v1182 = vmul.f32 %v849, %v1163
      %v1183 = vmul.f32 %v762, %v1163
      %v1184 = vmul.f32 %v866, %v1163
      %v1185 = vmul.f32 %v850, %v1163
      %v1186 = vmul.f32 %v765, %v1163
      %v1187 = vmul.f32 %v867, %v1163
      %v1188 = vmul.f32 %v851, %v1163
      %v1189 = vmul.f32 %v768, %v1163
      %v1190 = vmul.f32 %v868, %v1163
      %v1191 = vmul.f32 %v852, %v1163
      %v1192 = vmul.f32 %v771, %v1163
      %v1193 = vmul.f32 %v869, %v1163
      %v1194 = vmul.f32 %v853, %v1163
      %v1195 = vmul.f32 %v774, %v1163
      %v1196 = vmul.f32 %v870, %v1163
      %v1197 = vmul.f32 %v854, %v1163
      %v1198 = vmul.f32 %v777, %v1163
      %v1199 = vmul.f32 %v871, %v1163
      %v1200 = vmul.f32 %v855, %v1163
      %v1201 = vmul.f32 %v780, %v1163
      %v1202 = vmul.f32 %v872, %v1163
      %v1203 = vmul.f32 %v856, %v1163
      %v1204 = vmul.f32 %v783, %v1163
      %v1205 = vmul.f32 %v873, %v1163
      %v1206 = vmul.f32 %v857, %v1163
      %v1207 = vmul.f32 %v786, %v1163
      %v1208 = vmul.f32 %v874, %v1163
      %v1209 = vmul.f32 %v858, %v1163
      %v1210 = vmul.f32 %v789, %v1163
      %v1211 = vmul.f32 %v875, %v1163
      %vm1260 = vcmask 1045504
      %v1261 = vrot.slane %v1164, 2
      %v1262 = vrot.slane %v1165, 2
      %v1263 = vsel %vm1260, %v1261, %v1262
      %v1264 = vrot.slane %v1166, 2
      %v1265 = vsel %vm1260, %v1262, %v1264
      %v1266 = vrot.slane %v1167, 2
      %v1267 = vrot.slane %v1168, 2
      %v1268 = vsel %vm1260, %v1266, %v1267
      %v1269 = vrot.slane %v1169, 2
      %v1270 = vsel %vm1260, %v1267, %v1269
      %v1271 = vrot.slane %v1170, 2
      %v1272 = vrot.slane %v1171, 2
      %v1273 = vsel %vm1260, %v1271, %v1272
      %v1274 = vrot.slane %v1172, 2
      %v1275 = vsel %vm1260, %v1272, %v1274
      %v1276 = vrot.slane %v1173, 2
      %v1277 = vrot.slane %v1174, 2
      %v1278 = vsel %vm1260, %v1276, %v1277
      %v1279 = vrot.slane %v1175, 2
      %v1280 = vsel %vm1260, %v1277, %v1279
      %v1281 = vrot.slane %v1176, 2
      %v1282 = vrot.slane %v1177, 2
      %v1283 = vsel %vm1260, %v1281, %v1282
      %v1284 = vrot.slane %v1178, 2
      %v1285 = vsel %vm1260, %v1282, %v1284
      %v1286 = vrot.slane %v1179, 2
      %v1287 = vrot.slane %v1180, 2
      %v1288 = vsel %vm1260, %v1286, %v1287
      %v1289 = vrot.slane %v1181, 2
      %v1290 = vsel %vm1260, %v1287, %v1289
      %v1291 = vrot.slane %v1182, 2
      %v1292 = vrot.slane %v1183, 2
      %v1293 = vsel %vm1260, %v1291, %v1292
      %v1294 = vrot.slane %v1184, 2
      %v1295 = vsel %vm1260, %v1292, %v1294
      %v1296 = vrot.slane %v1185, 2
      %v1297 = vrot.slane %v1186, 2
      %v1298 = vsel %vm1260, %v1296, %v1297
      %v1299 = vrot.slane %v1187, 2
      %v1300 = vsel %vm1260, %v1297, %v1299
      %v1301 = vrot.slane %v1188, 2
      %v1302 = vrot.slane %v1189, 2
      %v1303 = vsel %vm1260, %v1301, %v1302
      %v1304 = vrot.slane %v1190, 2
      %v1305 = vsel %vm1260, %v1302, %v1304
      %v1306 = vrot.slane %v1191, 2
      %v1307 = vrot.slane %v1192, 2
      %v1308 = vsel %vm1260, %v1306, %v1307
      %v1309 = vrot.slane %v1193, 2
      %v1310 = vsel %vm1260, %v1307, %v1309
      %v1311 = vrot.slane %v1194, 2
      %v1312 = vrot.slane %v1195, 2
      %v1313 = vsel %vm1260, %v1311, %v1312
      %v1314 = vrot.slane %v1196, 2
      %v1315 = vsel %vm1260, %v1312, %v1314
      %v1316 = vrot.slane %v1197, 2
      %v1317 = vrot.slane %v1198, 2
      %v1318 = vsel %vm1260, %v1316, %v1317
      %v1319 = vrot.slane %v1199, 2
      %v1320 = vsel %vm1260, %v1317, %v1319
      %v1321 = vrot.slane %v1200, 2
      %v1322 = vrot.slane %v1201, 2
      %v1323 = vsel %vm1260, %v1321, %v1322
      %v1324 = vrot.slane %v1202, 2
      %v1325 = vsel %vm1260, %v1322, %v1324
      %v1326 = vrot.slane %v1203, 2
      %v1327 = vrot.slane %v1204, 2
      %v1328 = vsel %vm1260, %v1326, %v1327
      %v1329 = vrot.slane %v1205, 2
      %v1330 = vsel %vm1260, %v1327, %v1329
      %v1331 = vrot.slane %v1206, 2
      %v1332 = vrot.slane %v1207, 2
      %v1333 = vsel %vm1260, %v1331, %v1332
      %v1334 = vrot.slane %v1208, 2
      %v1335 = vsel %vm1260, %v1332, %v1334
      %v1336 = vrot.slane %v1209, 2
      %v1337 = vrot.slane %v1210, 2
      %v1338 = vsel %vm1260, %v1336, %v1337
      %v1339 = vrot.slane %v1211, 2
      %v1340 = vsel %vm1260, %v1337, %v1339
      %v1373 = vadd.f32 %v1128, %v1263
      %v1374 = vadd.f32 %v1129, %v1265
      %v1375 = vadd.f32 %v1130, %v1268
      %v1376 = vadd.f32 %v1131, %v1270
      %v1377 = vadd.f32 %v1132, %v1273
      %v1378 = vadd.f32 %v1133, %v1275
      %v1379 = vadd.f32 %v1134, %v1278
      %v1380 = vadd.f32 %v1135, %v1280
      %v1381 = vadd.f32 %v1136, %v1283
      %v1382 = vadd.f32 %v1137, %v1285
      %v1383 = vadd.f32 %v1138, %v1288
      %v1384 = vadd.f32 %v1139, %v1290
      %v1385 = vadd.f32 %v1140, %v1293
      %v1386 = vadd.f32 %v1141, %v1295
      %v1387 = vadd.f32 %v1142, %v1298
      %v1388 = vadd.f32 %v1143, %v1300
      %v1389 = vadd.f32 %v1144, %v1303
      %v1390 = vadd.f32 %v1145, %v1305
      %v1391 = vadd.f32 %v1146, %v1308
      %v1392 = vadd.f32 %v1147, %v1310
      %v1393 = vadd.f32 %v1148, %v1313
      %v1394 = vadd.f32 %v1149, %v1315
      %v1395 = vadd.f32 %v1150, %v1318
      %v1396 = vadd.f32 %v1151, %v1320
      %v1397 = vadd.f32 %v1152, %v1323
      %v1398 = vadd.f32 %v1153, %v1325
      %v1399 = vadd.f32 %v1154, %v1328
      %v1400 = vadd.f32 %v1155, %v1330
      %v1401 = vadd.f32 %v1156, %v1333
      %v1402 = vadd.f32 %v1157, %v1335
      %v1403 = vadd.f32 %v1158, %v1338
      %v1404 = vadd.f32 %v1159, %v1340
      %v1405 = vlaneseq
      %v1406 = vshrl.u32 %v1405, 7
      %v1407 = vsub.s32 3, %v1406
      %v1408 = vrot.slane %v877, %v1407
      %v1409 = vmul.f32 %v844, %v1408
      %v1410 = vmul.f32 %v747, %v1408
      %v1411 = vmul.f32 %v845, %v1408
      %v1412 = vmul.f32 %v750, %v1408
      %v1413 = vmul.f32 %v846, %v1408
      %v1414 = vmul.f32 %v753, %v1408
      %v1415 = vmul.f32 %v847, %v1408
      %v1416 = vmul.f32 %v756, %v1408
      %v1417 = vmul.f32 %v848, %v1408
      %v1418 = vmul.f32 %v759, %v1408
      %v1419 = vmul.f32 %v849, %v1408
      %v1420 = vmul.f32 %v762, %v1408
      %v1421 = vmul.f32 %v850, %v1408
      %v1422 = vmul.f32 %v765, %v1408
      %v1423 = vmul.f32 %v851, %v1408
      %v1424 = vmul.f32 %v768, %v1408
      %v1425 = vmul.f32 %v852, %v1408
      %v1426 = vmul.f32 %v771, %v1408
      %v1427 = vmul.f32 %v853, %v1408
      %v1428 = vmul.f32 %v774, %v1408
      %v1429 = vmul.f32 %v854, %v1408
      %v1430 = vmul.f32 %v777, %v1408
      %v1431 = vmul.f32 %v855, %v1408
      %v1432 = vmul.f32 %v780, %v1408
      %v1433 = vmul.f32 %v856, %v1408
      %v1434 = vmul.f32 %v783, %v1408
      %v1435 = vmul.f32 %v857, %v1408
      %v1436 = vmul.f32 %v786, %v1408
      %v1437 = vmul.f32 %v858, %v1408
      %v1438 = vmul.f32 %v789, %v1408
      %v1439 = vmul.f32 %v859, %v1408
      %v1440 = vmul.f32 %v792, %v1408
      %v1441 = vadd.f32 %v1373, %v1409
      %v1442 = vadd.f32 %v1374, %v1410
      %v1443 = vadd.f32 %v1375, %v1411
      %v1444 = vadd.f32 %v1376, %v1412
      %v1445 = vadd.f32 %v1377, %v1413
      %v1446 = vadd.f32 %v1378, %v1414
      %v1447 = vadd.f32 %v1379, %v1415
      %v1448 = vadd.f32 %v1380, %v1416
      %v1449 = vadd.f32 %v1381, %v1417
      %v1450 = vadd.f32 %v1382, %v1418
      %v1451 = vadd.f32 %v1383, %v1419
      %v1452 = vadd.f32 %v1384, %v1420
      %v1453 = vadd.f32 %v1385, %v1421
      %v1454 = vadd.f32 %v1386, %v1422
      %v1455 = vadd.f32 %v1387, %v1423
      %v1456 = vadd.f32 %v1388, %v1424
      %v1457 = vadd.f32 %v1389, %v1425
      %v1458 = vadd.f32 %v1390, %v1426
      %v1459 = vadd.f32 %v1391, %v1427
      %v1460 = vadd.f32 %v1392, %v1428
      %v1461 = vadd.f32 %v1393, %v1429
      %v1462 = vadd.f32 %v1394, %v1430
      %v1463 = vadd.f32 %v1395, %v1431
      %v1464 = vadd.f32 %v1396, %v1432
      %v1465 = vadd.f32 %v1397, %v1433
      %v1466 = vadd.f32 %v1398, %v1434
      %v1467 = vadd.f32 %v1399, %v1435
      %v1468 = vadd.f32 %v1400, %v1436
      %v1469 = vadd.f32 %v1401, %v1437
      %v1470 = vadd.f32 %v1402, %v1438
      %v1471 = vadd.f32 %v1403, %v1439
      %v1472 = vadd.f32 %v1404, %v1440
      %v1473 = vlaneseq
      %v1474 = vshrl.u32 %v1473, 7
      %v1475 = vsub.s32 4, %v1474
      %v1476 = vrot.slane %v877, %v1475
      %v1477 = vmul.f32 %v844, %v1476
      %v1478 = vmul.f32 %v747, %v1476
      %v1479 = vmul.f32 %v861, %v1476
      %v1480 = vmul.f32 %v845, %v1476
      %v1481 = vmul.f32 %v750, %v1476
      %v1482 = vmul.f32 %v862, %v1476
      %v1483 = vmul.f32 %v846, %v1476
      %v1484 = vmul.f32 %v753, %v1476
      %v1485 = vmul.f32 %v863, %v1476
      %v1486 = vmul.f32 %v847, %v1476
      %v1487 = vmul.f32 %v756, %v1476
      %v1488 = vmul.f32 %v864, %v1476
      %v1489 = vmul.f32 %v848, %v1476
      %v1490 = vmul.f32 %v759, %v1476
      %v1491 = vmul.f32 %v865, %v1476
      %v1492 = vmul.f32 %v849, %v1476
      %v1493 = vmul.f32 %v762, %v1476
      %v1494 = vmul.f32 %v866, %v1476
      %v1495 = vmul.f32 %v850, %v1476
      %v1496 = vmul.f32 %v765, %v1476
      %v1497 = vmul.f32 %v867, %v1476
      %v1498 = vmul.f32 %v851, %v1476
      %v1499 = vmul.f32 %v768, %v1476
      %v1500 = vmul.f32 %v868, %v1476
      %v1501 = vmul.f32 %v852, %v1476
      %v1502 = vmul.f32 %v771, %v1476
      %v1503 = vmul.f32 %v869, %v1476
      %v1504 = vmul.f32 %v853, %v1476
      %v1505 = vmul.f32 %v774, %v1476
      %v1506 = vmul.f32 %v870, %v1476
      %v1507 = vmul.f32 %v854, %v1476
      %v1508 = vmul.f32 %v777, %v1476
      %v1509 = vmul.f32 %v871, %v1476
      %v1510 = vmul.f32 %v855, %v1476
      %v1511 = vmul.f32 %v780, %v1476
      %v1512 = vmul.f32 %v872, %v1476
      %v1513 = vmul.f32 %v856, %v1476
      %v1514 = vmul.f32 %v783, %v1476
      %v1515 = vmul.f32 %v873, %v1476
      %v1516 = vmul.f32 %v857, %v1476
      %v1517 = vmul.f32 %v786, %v1476
      %v1518 = vmul.f32 %v874, %v1476
      %v1519 = vmul.f32 %v858, %v1476
      %v1520 = vmul.f32 %v789, %v1476
      %v1521 = vmul.f32 %v875, %v1476
      %v1522 = vmul.f32 %v859, %v1476
      %v1523 = vmul.f32 %v792, %v1476
      %v1524 = vmul.f32 %v876, %v1476
      %v1573 = vrot.slane %v1477, 1
      %v1574 = vrot.slane %v1478, 1
      %v1575 = vsel %vm1015, %v1573, %v1574
      %v1576 = vrot.slane %v1479, 1
      %v1577 = vsel %vm1015, %v1574, %v1576
      %v1578 = vrot.slane %v1480, 1
      %v1579 = vrot.slane %v1481, 1
      %v1580 = vsel %vm1015, %v1578, %v1579
      %v1581 = vrot.slane %v1482, 1
      %v1582 = vsel %vm1015, %v1579, %v1581
      %v1583 = vrot.slane %v1483, 1
      %v1584 = vrot.slane %v1484, 1
      %v1585 = vsel %vm1015, %v1583, %v1584
      %v1586 = vrot.slane %v1485, 1
      %v1587 = vsel %vm1015, %v1584, %v1586
      %v1588 = vrot.slane %v1486, 1
      %v1589 = vrot.slane %v1487, 1
      %v1590 = vsel %vm1015, %v1588, %v1589
      %v1591 = vrot.slane %v1488, 1
      %v1592 = vsel %vm1015, %v1589, %v1591
      %v1593 = vrot.slane %v1489, 1
      %v1594 = vrot.slane %v1490, 1
      %v1595 = vsel %vm1015, %v1593, %v1594
      %v1596 = vrot.slane %v1491, 1
      %v1597 = vsel %vm1015, %v1594, %v1596
      %v1598 = vrot.slane %v1492, 1
      %v1599 = vrot.slane %v1493, 1
      %v1600 = vsel %vm1015, %v1598, %v1599
      %v1601 = vrot.slane %v1494, 1
      %v1602 = vsel %vm1015, %v1599, %v1601
      %v1603 = vrot.slane %v1495, 1
      %v1604 = vrot.slane %v1496, 1
      %v1605 = vsel %vm1015, %v1603, %v1604
      %v1606 = vrot.slane %v1497, 1
      %v1607 = vsel %vm1015, %v1604, %v1606
      %v1608 = vrot.slane %v1498, 1
      %v1609 = vrot.slane %v1499, 1
      %v1610 = vsel %vm1015, %v1608, %v1609
      %v1611 = vrot.slane %v1500, 1
      %v1612 = vsel %vm1015, %v1609, %v1611
      %v1613 = vrot.slane %v1501, 1
      %v1614 = vrot.slane %v1502, 1
      %v1615 = vsel %vm1015, %v1613, %v1614
      %v1616 = vrot.slane %v1503, 1
      %v1617 = vsel %vm1015, %v1614, %v1616
      %v1618 = vrot.slane %v1504, 1
      %v1619 = vrot.slane %v1505, 1
      %v1620 = vsel %vm1015, %v1618, %v1619
      %v1621 = vrot.slane %v1506, 1
      %v1622 = vsel %vm1015, %v1619, %v1621
      %v1623 = vrot.slane %v1507, 1
      %v1624 = vrot.slane %v1508, 1
      %v1625 = vsel %vm1015, %v1623, %v1624
      %v1626 = vrot.slane %v1509, 1
      %v1627 = vsel %vm1015, %v1624, %v1626
      %v1628 = vrot.slane %v1510, 1
      %v1629 = vrot.slane %v1511, 1
      %v1630 = vsel %vm1015, %v1628, %v1629
      %v1631 = vrot.slane %v1512, 1
      %v1632 = vsel %vm1015, %v1629, %v1631
      %v1633 = vrot.slane %v1513, 1
      %v1634 = vrot.slane %v1514, 1
      %v1635 = vsel %vm1015, %v1633, %v1634
      %v1636 = vrot.slane %v1515, 1
      %v1637 = vsel %vm1015, %v1634, %v1636
      %v1638 = vrot.slane %v1516, 1
      %v1639 = vrot.slane %v1517, 1
      %v1640 = vsel %vm1015, %v1638, %v1639
      %v1641 = vrot.slane %v1518, 1
      %v1642 = vsel %vm1015, %v1639, %v1641
      %v1643 = vrot.slane %v1519, 1
      %v1644 = vrot.slane %v1520, 1
      %v1645 = vsel %vm1015, %v1643, %v1644
      %v1646 = vrot.slane %v1521, 1
      %v1647 = vsel %vm1015, %v1644, %v1646
      %v1648 = vrot.slane %v1522, 1
      %v1649 = vrot.slane %v1523, 1
      %v1650 = vsel %vm1015, %v1648, %v1649
      %v1651 = vrot.slane %v1524, 1
      %v1652 = vsel %vm1015, %v1649, %v1651
      %v1685 = vadd.f32 %v1441, %v1575
      %v1686 = vadd.f32 %v1442, %v1577
      %v1687 = vadd.f32 %v1443, %v1580
      %v1688 = vadd.f32 %v1444, %v1582
      %v1689 = vadd.f32 %v1445, %v1585
      %v1690 = vadd.f32 %v1446, %v1587
      %v1691 = vadd.f32 %v1447, %v1590
      %v1692 = vadd.f32 %v1448, %v1592
      %v1693 = vadd.f32 %v1449, %v1595
      %v1694 = vadd.f32 %v1450, %v1597
      %v1695 = vadd.f32 %v1451, %v1600
      %v1696 = vadd.f32 %v1452, %v1602
      %v1697 = vadd.f32 %v1453, %v1605
      %v1698 = vadd.f32 %v1454, %v1607
      %v1699 = vadd.f32 %v1455, %v1610
      %v1700 = vadd.f32 %v1456, %v1612
      %v1701 = vadd.f32 %v1457, %v1615
      %v1702 = vadd.f32 %v1458, %v1617
      %v1703 = vadd.f32 %v1459, %v1620
      %v1704 = vadd.f32 %v1460, %v1622
      %v1705 = vadd.f32 %v1461, %v1625
      %v1706 = vadd.f32 %v1462, %v1627
      %v1707 = vadd.f32 %v1463, %v1630
      %v1708 = vadd.f32 %v1464, %v1632
      %v1709 = vadd.f32 %v1465, %v1635
      %v1710 = vadd.f32 %v1466, %v1637
      %v1711 = vadd.f32 %v1467, %v1640
      %v1712 = vadd.f32 %v1468, %v1642
      %v1713 = vadd.f32 %v1469, %v1645
      %v1714 = vadd.f32 %v1470, %v1647
      %v1715 = vadd.f32 %v1471, %v1650
      %v1716 = vadd.f32 %v1472, %v1652
      %v1717 = vlaneseq
      %v1718 = vshrl.u32 %v1717, 7
      %v1719 = vsub.s32 5, %v1718
      %v1720 = vrot.slane %v877, %v1719
      %v1721 = vmul.f32 %v844, %v1720
      %v1722 = vmul.f32 %v747, %v1720
      %v1723 = vmul.f32 %v861, %v1720
      %v1724 = vmul.f32 %v845, %v1720
      %v1725 = vmul.f32 %v750, %v1720
      %v1726 = vmul.f32 %v862, %v1720
      %v1727 = vmul.f32 %v846, %v1720
      %v1728 = vmul.f32 %v753, %v1720
      %v1729 = vmul.f32 %v863, %v1720
      %v1730 = vmul.f32 %v847, %v1720
      %v1731 = vmul.f32 %v756, %v1720
      %v1732 = vmul.f32 %v864, %v1720
      %v1733 = vmul.f32 %v848, %v1720
      %v1734 = vmul.f32 %v759, %v1720
      %v1735 = vmul.f32 %v865, %v1720
      %v1736 = vmul.f32 %v849, %v1720
      %v1737 = vmul.f32 %v762, %v1720
      %v1738 = vmul.f32 %v866, %v1720
      %v1739 = vmul.f32 %v850, %v1720
      %v1740 = vmul.f32 %v765, %v1720
      %v1741 = vmul.f32 %v867, %v1720
      %v1742 = vmul.f32 %v851, %v1720
      %v1743 = vmul.f32 %v768, %v1720
      %v1744 = vmul.f32 %v868, %v1720
      %v1745 = vmul.f32 %v852, %v1720
      %v1746 = vmul.f32 %v771, %v1720
      %v1747 = vmul.f32 %v869, %v1720
      %v1748 = vmul.f32 %v853, %v1720
      %v1749 = vmul.f32 %v774, %v1720
      %v1750 = vmul.f32 %v870, %v1720
      %v1751 = vmul.f32 %v854, %v1720
      %v1752 = vmul.f32 %v777, %v1720
      %v1753 = vmul.f32 %v871, %v1720
      %v1754 = vmul.f32 %v855, %v1720
      %v1755 = vmul.f32 %v780, %v1720
      %v1756 = vmul.f32 %v872, %v1720
      %v1757 = vmul.f32 %v856, %v1720
      %v1758 = vmul.f32 %v783, %v1720
      %v1759 = vmul.f32 %v873, %v1720
      %v1760 = vmul.f32 %v857, %v1720
      %v1761 = vmul.f32 %v786, %v1720
      %v1762 = vmul.f32 %v874, %v1720
      %v1763 = vmul.f32 %v858, %v1720
      %v1764 = vmul.f32 %v789, %v1720
      %v1765 = vmul.f32 %v875, %v1720
      %v1766 = vmul.f32 %v859, %v1720
      %v1767 = vmul.f32 %v792, %v1720
      %v1768 = vmul.f32 %v876, %v1720
      %v1817 = vrot.slane %v1721, 2
      %v1818 = vrot.slane %v1722, 2
      %v1819 = vsel %vm1260, %v1817, %v1818
      %v1820 = vrot.slane %v1723, 2
      %v1821 = vsel %vm1260, %v1818, %v1820
      %v1822 = vrot.slane %v1724, 2
      %v1823 = vrot.slane %v1725, 2
      %v1824 = vsel %vm1260, %v1822, %v1823
      %v1825 = vrot.slane %v1726, 2
      %v1826 = vsel %vm1260, %v1823, %v1825
      %v1827 = vrot.slane %v1727, 2
      %v1828 = vrot.slane %v1728, 2
      %v1829 = vsel %vm1260, %v1827, %v1828
      %v1830 = vrot.slane %v1729, 2
      %v1831 = vsel %vm1260, %v1828, %v1830
      %v1832 = vrot.slane %v1730, 2
      %v1833 = vrot.slane %v1731, 2
      %v1834 = vsel %vm1260, %v1832, %v1833
      %v1835 = vrot.slane %v1732, 2
      %v1836 = vsel %vm1260, %v1833, %v1835
      %v1837 = vrot.slane %v1733, 2
      %v1838 = vrot.slane %v1734, 2
      %v1839 = vsel %vm1260, %v1837, %v1838
      %v1840 = vrot.slane %v1735, 2
      %v1841 = vsel %vm1260, %v1838, %v1840
      %v1842 = vrot.slane %v1736, 2
      %v1843 = vrot.slane %v1737, 2
      %v1844 = vsel %vm1260, %v1842, %v1843
      %v1845 = vrot.slane %v1738, 2
      %v1846 = vsel %vm1260, %v1843, %v1845
      %v1847 = vrot.slane %v1739, 2
      %v1848 = vrot.slane %v1740, 2
      %v1849 = vsel %vm1260, %v1847, %v1848
      %v1850 = vrot.slane %v1741, 2
      %v1851 = vsel %vm1260, %v1848, %v1850
      %v1852 = vrot.slane %v1742, 2
      %v1853 = vrot.slane %v1743, 2
      %v1854 = vsel %vm1260, %v1852, %v1853
      %v1855 = vrot.slane %v1744, 2
      %v1856 = vsel %vm1260, %v1853, %v1855
      %v1857 = vrot.slane %v1745, 2
      %v1858 = vrot.slane %v1746, 2
      %v1859 = vsel %vm1260, %v1857, %v1858
      %v1860 = vrot.slane %v1747, 2
      %v1861 = vsel %vm1260, %v1858, %v1860
      %v1862 = vrot.slane %v1748, 2
      %v1863 = vrot.slane %v1749, 2
      %v1864 = vsel %vm1260, %v1862, %v1863
      %v1865 = vrot.slane %v1750, 2
      %v1866 = vsel %vm1260, %v1863, %v1865
      %v1867 = vrot.slane %v1751, 2
      %v1868 = vrot.slane %v1752, 2
      %v1869 = vsel %vm1260, %v1867, %v1868
      %v1870 = vrot.slane %v1753, 2
      %v1871 = vsel %vm1260, %v1868, %v1870
      %v1872 = vrot.slane %v1754, 2
      %v1873 = vrot.slane %v1755, 2
      %v1874 = vsel %vm1260, %v1872, %v1873
      %v1875 = vrot.slane %v1756, 2
      %v1876 = vsel %vm1260, %v1873, %v1875
      %v1877 = vrot.slane %v1757, 2
      %v1878 = vrot.slane %v1758, 2
      %v1879 = vsel %vm1260, %v1877, %v1878
      %v1880 = vrot.slane %v1759, 2
      %v1881 = vsel %vm1260, %v1878, %v1880
      %v1882 = vrot.slane %v1760, 2
      %v1883 = vrot.slane %v1761, 2
      %v1884 = vsel %vm1260, %v1882, %v1883
      %v1885 = vrot.slane %v1762, 2
      %v1886 = vsel %vm1260, %v1883, %v1885
      %v1887 = vrot.slane %v1763, 2
      %v1888 = vrot.slane %v1764, 2
      %v1889 = vsel %vm1260, %v1887, %v1888
      %v1890 = vrot.slane %v1765, 2
      %v1891 = vsel %vm1260, %v1888, %v1890
      %v1892 = vrot.slane %v1766, 2
      %v1893 = vrot.slane %v1767, 2
      %v1894 = vsel %vm1260, %v1892, %v1893
      %v1895 = vrot.slane %v1768, 2
      %v1896 = vsel %vm1260, %v1893, %v1895
      %v1929 = vadd.f32 %v1685, %v1819
      %v1930 = vadd.f32 %v1686, %v1821
      %v1931 = vadd.f32 %v1687, %v1824
      %v1932 = vadd.f32 %v1688, %v1826
      %v1933 = vadd.f32 %v1689, %v1829
      %v1934 = vadd.f32 %v1690, %v1831
      %v1935 = vadd.f32 %v1691, %v1834
      %v1936 = vadd.f32 %v1692, %v1836
      %v1937 = vadd.f32 %v1693, %v1839
      %v1938 = vadd.f32 %v1694, %v1841
      %v1939 = vadd.f32 %v1695, %v1844
      %v1940 = vadd.f32 %v1696, %v1846
      %v1941 = vadd.f32 %v1697, %v1849
      %v1942 = vadd.f32 %v1698, %v1851
      %v1943 = vadd.f32 %v1699, %v1854
      %v1944 = vadd.f32 %v1700, %v1856
      %v1945 = vadd.f32 %v1701, %v1859
      %v1946 = vadd.f32 %v1702, %v1861
      %v1947 = vadd.f32 %v1703, %v1864
      %v1948 = vadd.f32 %v1704, %v1866
      %v1949 = vadd.f32 %v1705, %v1869
      %v1950 = vadd.f32 %v1706, %v1871
      %v1951 = vadd.f32 %v1707, %v1874
      %v1952 = vadd.f32 %v1708, %v1876
      %v1953 = vadd.f32 %v1709, %v1879
      %v1954 = vadd.f32 %v1710, %v1881
      %v1955 = vadd.f32 %v1711, %v1884
      %v1956 = vadd.f32 %v1712, %v1886
      %v1957 = vadd.f32 %v1713, %v1889
      %v1958 = vadd.f32 %v1714, %v1891
      %v1959 = vadd.f32 %v1715, %v1894
      %v1960 = vadd.f32 %v1716, %v1896
      %v1961 = vlaneseq
      %v1962 = vshrl.u32 %v1961, 7
      %v1963 = vsub.s32 6, %v1962
      %v1964 = vrot.slane %v877, %v1963
      %v1965 = vmul.f32 %v845, %v1964
      %v1966 = vmul.f32 %v750, %v1964
      %v1967 = vmul.f32 %v846, %v1964
      %v1968 = vmul.f32 %v753, %v1964
      %v1969 = vmul.f32 %v847, %v1964
      %v1970 = vmul.f32 %v756, %v1964
      %v1971 = vmul.f32 %v848, %v1964
      %v1972 = vmul.f32 %v759, %v1964
      %v1973 = vmul.f32 %v849, %v1964
      %v1974 = vmul.f32 %v762, %v1964
      %v1975 = vmul.f32 %v850, %v1964
      %v1976 = vmul.f32 %v765, %v1964
      %v1977 = vmul.f32 %v851, %v1964
      %v1978 = vmul.f32 %v768, %v1964
      %v1979 = vmul.f32 %v852, %v1964
      %v1980 = vmul.f32 %v771, %v1964
      %v1981 = vmul.f32 %v853, %v1964
      %v1982 = vmul.f32 %v774, %v1964
      %v1983 = vmul.f32 %v854, %v1964
      %v1984 = vmul.f32 %v777, %v1964
      %v1985 = vmul.f32 %v855, %v1964
      %v1986 = vmul.f32 %v780, %v1964
      %v1987 = vmul.f32 %v856, %v1964
      %v1988 = vmul.f32 %v783, %v1964
      %v1989 = vmul.f32 %v857, %v1964
      %v1990 = vmul.f32 %v786, %v1964
      %v1991 = vmul.f32 %v858, %v1964
      %v1992 = vmul.f32 %v789, %v1964
      %v1993 = vmul.f32 %v859, %v1964
      %v1994 = vmul.f32 %v792, %v1964
      %v1995 = vmul.f32 %v843, %v1964
      %v1996 = vmul.f32 %v744, %v1964
      %v1997 = vadd.f32 %v1929, %v1965
      %v1998 = vadd.f32 %v1930, %v1966
      %v1999 = vadd.f32 %v1931, %v1967
      %v2000 = vadd.f32 %v1932, %v1968
      %v2001 = vadd.f32 %v1933, %v1969
      %v2002 = vadd.f32 %v1934, %v1970
      %v2003 = vadd.f32 %v1935, %v1971
      %v2004 = vadd.f32 %v1936, %v1972
      %v2005 = vadd.f32 %v1937, %v1973
      %v2006 = vadd.f32 %v1938, %v1974
      %v2007 = vadd.f32 %v1939, %v1975
      %v2008 = vadd.f32 %v1940, %v1976
      %v2009 = vadd.f32 %v1941, %v1977
      %v2010 = vadd.f32 %v1942, %v1978
      %v2011 = vadd.f32 %v1943, %v1979
      %v2012 = vadd.f32 %v1944, %v1980
      %v2013 = vadd.f32 %v1945, %v1981
      %v2014 = vadd.f32 %v1946, %v1982
      %v2015 = vadd.f32 %v1947, %v1983
      %v2016 = vadd.f32 %v1948, %v1984
      %v2017 = vadd.f32 %v1949, %v1985
      %v2018 = vadd.f32 %v1950, %v1986
      %v2019 = vadd.f32 %v1951, %v1987
      %v2020 = vadd.f32 %v1952, %v1988
      %v2021 = vadd.f32 %v1953, %v1989
      %v2022 = vadd.f32 %v1954, %v1990
      %v2023 = vadd.f32 %v1955, %v1991
      %v2024 = vadd.f32 %v1956, %v1992
      %v2025 = vadd.f32 %v1957, %v1993
      %v2026 = vadd.f32 %v1958, %v1994
      %v2027 = vadd.f32 %v1959, %v1995
      %v2028 = vadd.f32 %v1960, %v1996
      %v2029 = vlaneseq
      %v2030 = vshrl.u32 %v2029, 7
      %v2031 = vsub.s32 7, %v2030
      %v2032 = vrot.slane %v877, %v2031
      %v2033 = vmul.f32 %v845, %v2032
      %v2034 = vmul.f32 %v750, %v2032
      %v2035 = vmul.f32 %v862, %v2032
      %v2036 = vmul.f32 %v846, %v2032
      %v2037 = vmul.f32 %v753, %v2032
      %v2038 = vmul.f32 %v863, %v2032
      %v2039 = vmul.f32 %v847, %v2032
      %v2040 = vmul.f32 %v756, %v2032
      %v2041 = vmul.f32 %v864, %v2032
      %v2042 = vmul.f32 %v848, %v2032
      %v2043 = vmul.f32 %v759, %v2032
      %v2044 = vmul.f32 %v865, %v2032
      %v2045 = vmul.f32 %v849, %v2032
      %v2046 = vmul.f32 %v762, %v2032
      %v2047 = vmul.f32 %v866, %v2032
      %v2048 = vmul.f32 %v850, %v2032
      %v2049 = vmul.f32 %v765, %v2032
      %v2050 = vmul.f32 %v867, %v2032
      %v2051 = vmul.f32 %v851, %v2032
      %v2052 = vmul.f32 %v768, %v2032
      %v2053 = vmul.f32 %v868, %v2032
      %v2054 = vmul.f32 %v852, %v2032
      %v2055 = vmul.f32 %v771, %v2032
      %v2056 = vmul.f32 %v869, %v2032
      %v2057 = vmul.f32 %v853, %v2032
      %v2058 = vmul.f32 %v774, %v2032
      %v2059 = vmul.f32 %v870, %v2032
      %v2060 = vmul.f32 %v854, %v2032
      %v2061 = vmul.f32 %v777, %v2032
      %v2062 = vmul.f32 %v871, %v2032
      %v2063 = vmul.f32 %v855, %v2032
      %v2064 = vmul.f32 %v780, %v2032
      %v2065 = vmul.f32 %v872, %v2032
      %v2066 = vmul.f32 %v856, %v2032
      %v2067 = vmul.f32 %v783, %v2032
      %v2068 = vmul.f32 %v873, %v2032
      %v2069 = vmul.f32 %v857, %v2032
      %v2070 = vmul.f32 %v786, %v2032
      %v2071 = vmul.f32 %v874, %v2032
      %v2072 = vmul.f32 %v858, %v2032
      %v2073 = vmul.f32 %v789, %v2032
      %v2074 = vmul.f32 %v875, %v2032
      %v2075 = vmul.f32 %v859, %v2032
      %v2076 = vmul.f32 %v792, %v2032
      %v2077 = vmul.f32 %v876, %v2032
      %v2078 = vmul.f32 %v843, %v2032
      %v2079 = vmul.f32 %v744, %v2032
      %v2080 = vmul.f32 %v860, %v2032
      %v2129 = vrot.slane %v2033, 1
      %v2130 = vrot.slane %v2034, 1
      %v2131 = vsel %vm1015, %v2129, %v2130
      %v2132 = vrot.slane %v2035, 1
      %v2133 = vsel %vm1015, %v2130, %v2132
      %v2134 = vrot.slane %v2036, 1
      %v2135 = vrot.slane %v2037, 1
      %v2136 = vsel %vm1015, %v2134, %v2135
      %v2137 = vrot.slane %v2038, 1
      %v2138 = vsel %vm1015, %v2135, %v2137
      %v2139 = vrot.slane %v2039, 1
      %v2140 = vrot.slane %v2040, 1
      %v2141 = vsel %vm1015, %v2139, %v2140
      %v2142 = vrot.slane %v2041, 1
      %v2143 = vsel %vm1015, %v2140, %v2142
      %v2144 = vrot.slane %v2042, 1
      %v2145 = vrot.slane %v2043, 1
      %v2146 = vsel %vm1015, %v2144, %v2145
      %v2147 = vrot.slane %v2044, 1
      %v2148 = vsel %vm1015, %v2145, %v2147
      %v2149 = vrot.slane %v2045, 1
      %v2150 = vrot.slane %v2046, 1
      %v2151 = vsel %vm1015, %v2149, %v2150
      %v2152 = vrot.slane %v2047, 1
      %v2153 = vsel %vm1015, %v2150, %v2152
      %v2154 = vrot.slane %v2048, 1
      %v2155 = vrot.slane %v2049, 1
      %v2156 = vsel %vm1015, %v2154, %v2155
      %v2157 = vrot.slane %v2050, 1
      %v2158 = vsel %vm1015, %v2155, %v2157
      %v2159 = vrot.slane %v2051, 1
      %v2160 = vrot.slane %v2052, 1
      %v2161 = vsel %vm1015, %v2159, %v2160
      %v2162 = vrot.slane %v2053, 1
      %v2163 = vsel %vm1015, %v2160, %v2162
      %v2164 = vrot.slane %v2054, 1
      %v2165 = vrot.slane %v2055, 1
      %v2166 = vsel %vm1015, %v2164, %v2165
      %v2167 = vrot.slane %v2056, 1
      %v2168 = vsel %vm1015, %v2165, %v2167
      %v2169 = vrot.slane %v2057, 1
      %v2170 = vrot.slane %v2058, 1
      %v2171 = vsel %vm1015, %v2169, %v2170
      %v2172 = vrot.slane %v2059, 1
      %v2173 = vsel %vm1015, %v2170, %v2172
      %v2174 = vrot.slane %v2060, 1
      %v2175 = vrot.slane %v2061, 1
      %v2176 = vsel %vm1015, %v2174, %v2175
      %v2177 = vrot.slane %v2062, 1
      %v2178 = vsel %vm1015, %v2175, %v2177
      %v2179 = vrot.slane %v2063, 1
      %v2180 = vrot.slane %v2064, 1
      %v2181 = vsel %vm1015, %v2179, %v2180
      %v2182 = vrot.slane %v2065, 1
      %v2183 = vsel %vm1015, %v2180, %v2182
      %v2184 = vrot.slane %v2066, 1
      %v2185 = vrot.slane %v2067, 1
      %v2186 = vsel %vm1015, %v2184, %v2185
      %v2187 = vrot.slane %v2068, 1
      %v2188 = vsel %vm1015, %v2185, %v2187
      %v2189 = vrot.slane %v2069, 1
      %v2190 = vrot.slane %v2070, 1
      %v2191 = vsel %vm1015, %v2189, %v2190
      %v2192 = vrot.slane %v2071, 1
      %v2193 = vsel %vm1015, %v2190, %v2192
      %v2194 = vrot.slane %v2072, 1
      %v2195 = vrot.slane %v2073, 1
      %v2196 = vsel %vm1015, %v2194, %v2195
      %v2197 = vrot.slane %v2074, 1
      %v2198 = vsel %vm1015, %v2195, %v2197
      %v2199 = vrot.slane %v2075, 1
      %v2200 = vrot.slane %v2076, 1
      %v2201 = vsel %vm1015, %v2199, %v2200
      %v2202 = vrot.slane %v2077, 1
      %v2203 = vsel %vm1015, %v2200, %v2202
      %v2204 = vrot.slane %v2078, 1
      %v2205 = vrot.slane %v2079, 1
      %v2206 = vsel %vm1015, %v2204, %v2205
      %v2207 = vrot.slane %v2080, 1
      %v2208 = vsel %vm1015, %v2205, %v2207
      %v2241 = vadd.f32 %v1997, %v2131
      %v2242 = vadd.f32 %v1998, %v2133
      %v2243 = vadd.f32 %v1999, %v2136
      %v2244 = vadd.f32 %v2000, %v2138
      %v2245 = vadd.f32 %v2001, %v2141
      %v2246 = vadd.f32 %v2002, %v2143
      %v2247 = vadd.f32 %v2003, %v2146
      %v2248 = vadd.f32 %v2004, %v2148
      %v2249 = vadd.f32 %v2005, %v2151
      %v2250 = vadd.f32 %v2006, %v2153
      %v2251 = vadd.f32 %v2007, %v2156
      %v2252 = vadd.f32 %v2008, %v2158
      %v2253 = vadd.f32 %v2009, %v2161
      %v2254 = vadd.f32 %v2010, %v2163
      %v2255 = vadd.f32 %v2011, %v2166
      %v2256 = vadd.f32 %v2012, %v2168
      %v2257 = vadd.f32 %v2013, %v2171
      %v2258 = vadd.f32 %v2014, %v2173
      %v2259 = vadd.f32 %v2015, %v2176
      %v2260 = vadd.f32 %v2016, %v2178
      %v2261 = vadd.f32 %v2017, %v2181
      %v2262 = vadd.f32 %v2018, %v2183
      %v2263 = vadd.f32 %v2019, %v2186
      %v2264 = vadd.f32 %v2020, %v2188
      %v2265 = vadd.f32 %v2021, %v2191
      %v2266 = vadd.f32 %v2022, %v2193
      %v2267 = vadd.f32 %v2023, %v2196
      %v2268 = vadd.f32 %v2024, %v2198
      %v2269 = vadd.f32 %v2025, %v2201
      %v2270 = vadd.f32 %v2026, %v2203
      %v2271 = vadd.f32 %v2027, %v2206
      %v2272 = vadd.f32 %v2028, %v2208
      %v2273 = vlaneseq
      %v2274 = vshrl.u32 %v2273, 7
      %v2275 = vsub.s32 0, %v2274
      %v2276 = vrot.slane %v878, %v2275
      %v2277 = vmul.f32 %v845, %v2276
      %v2278 = vmul.f32 %v750, %v2276
      %v2279 = vmul.f32 %v862, %v2276
      %v2280 = vmul.f32 %v846, %v2276
      %v2281 = vmul.f32 %v753, %v2276
      %v2282 = vmul.f32 %v863, %v2276
      %v2283 = vmul.f32 %v847, %v2276
      %v2284 = vmul.f32 %v756, %v2276
      %v2285 = vmul.f32 %v864, %v2276
      %v2286 = vmul.f32 %v848, %v2276
      %v2287 = vmul.f32 %v759, %v2276
      %v2288 = vmul.f32 %v865, %v2276
      %v2289 = vmul.f32 %v849, %v2276
      %v2290 = vmul.f32 %v762, %v2276
      %v2291 = vmul.f32 %v866, %v2276
      %v2292 = vmul.f32 %v850, %v2276
      %v2293 = vmul.f32 %v765, %v2276
      %v2294 = vmul.f32 %v867, %v2276
      %v2295 = vmul.f32 %v851, %v2276
      %v2296 = vmul.f32 %v768, %v2276
      %v2297 = vmul.f32 %v868, %v2276
      %v2298 = vmul.f32 %v852, %v2276
      %v2299 = vmul.f32 %v771, %v2276
      %v2300 = vmul.f32 %v869, %v2276
      %v2301 = vmul.f32 %v853, %v2276
      %v2302 = vmul.f32 %v774, %v2276
      %v2303 = vmul.f32 %v870, %v2276
      %v2304 = vmul.f32 %v854, %v2276
      %v2305 = vmul.f32 %v777, %v2276
      %v2306 = vmul.f32 %v871, %v2276
      %v2307 = vmul.f32 %v855, %v2276
      %v2308 = vmul.f32 %v780, %v2276
      %v2309 = vmul.f32 %v872, %v2276
      %v2310 = vmul.f32 %v856, %v2276
      %v2311 = vmul.f32 %v783, %v2276
      %v2312 = vmul.f32 %v873, %v2276
      %v2313 = vmul.f32 %v857, %v2276
      %v2314 = vmul.f32 %v786, %v2276
      %v2315 = vmul.f32 %v874, %v2276
      %v2316 = vmul.f32 %v858, %v2276
      %v2317 = vmul.f32 %v789, %v2276
      %v2318 = vmul.f32 %v875, %v2276
      %v2319 = vmul.f32 %v859, %v2276
      %v2320 = vmul.f32 %v792, %v2276
      %v2321 = vmul.f32 %v876, %v2276
      %v2322 = vmul.f32 %v843, %v2276
      %v2323 = vmul.f32 %v744, %v2276
      %v2324 = vmul.f32 %v860, %v2276
      %v2373 = vrot.slane %v2277, 2
      %v2374 = vrot.slane %v2278, 2
      %v2375 = vsel %vm1260, %v2373, %v2374
      %v2376 = vrot.slane %v2279, 2
      %v2377 = vsel %vm1260, %v2374, %v2376
      %v2378 = vrot.slane %v2280, 2
      %v2379 = vrot.slane %v2281, 2
      %v2380 = vsel %vm1260, %v2378, %v2379
      %v2381 = vrot.slane %v2282, 2
      %v2382 = vsel %vm1260, %v2379, %v2381
      %v2383 = vrot.slane %v2283, 2
      %v2384 = vrot.slane %v2284, 2
      %v2385 = vsel %vm1260, %v2383, %v2384
      %v2386 = vrot.slane %v2285, 2
      %v2387 = vsel %vm1260, %v2384, %v2386
      %v2388 = vrot.slane %v2286, 2
      %v2389 = vrot.slane %v2287, 2
      %v2390 = vsel %vm1260, %v2388, %v2389
      %v2391 = vrot.slane %v2288, 2
      %v2392 = vsel %vm1260, %v2389, %v2391
      %v2393 = vrot.slane %v2289, 2
      %v2394 = vrot.slane %v2290, 2
      %v2395 = vsel %vm1260, %v2393, %v2394
      %v2396 = vrot.slane %v2291, 2
      %v2397 = vsel %vm1260, %v2394, %v2396
      %v2398 = vrot.slane %v2292, 2
      %v2399 = vrot.slane %v2293, 2
      %v2400 = vsel %vm1260, %v2398, %v2399
      %v2401 = vrot.slane %v2294, 2
      %v2402 = vsel %vm1260, %v2399, %v2401
      %v2403 = vrot.slane %v2295, 2
      %v2404 = vrot.slane %v2296, 2
      %v2405 = vsel %vm1260, %v2403, %v2404
      %v2406 = vrot.slane %v2297, 2
      %v2407 = vsel %vm1260, %v2404, %v2406
      %v2408 = vrot.slane %v2298, 2
      %v2409 = vrot.slane %v2299, 2
      %v2410 = vsel %vm1260, %v2408, %v2409
      %v2411 = vrot.slane %v2300, 2
      %v2412 = vsel %vm1260, %v2409, %v2411
      %v2413 = vrot.slane %v2301, 2
      %v2414 = vrot.slane %v2302, 2
      %v2415 = vsel %vm1260, %v2413, %v2414
      %v2416 = vrot.slane %v2303, 2
      %v2417 = vsel %vm1260, %v2414, %v2416
      %v2418 = vrot.slane %v2304, 2
      %v2419 = vrot.slane %v2305, 2
      %v2420 = vsel %vm1260, %v2418, %v2419
      %v2421 = vrot.slane %v2306, 2
      %v2422 = vsel %vm1260, %v2419, %v2421
      %v2423 = vrot.slane %v2307, 2
      %v2424 = vrot.slane %v2308, 2
      %v2425 = vsel %vm1260, %v2423, %v2424
      %v2426 = vrot.slane %v2309, 2
      %v2427 = vsel %vm1260, %v2424, %v2426
      %v2428 = vrot.slane %v2310, 2
      %v2429 = vrot.slane %v2311, 2
      %v2430 = vsel %vm1260, %v2428, %v2429
      %v2431 = vrot.slane %v2312, 2
      %v2432 = vsel %vm1260, %v2429, %v2431
      %v2433 = vrot.slane %v2313, 2
      %v2434 = vrot.slane %v2314, 2
      %v2435 = vsel %vm1260, %v2433, %v2434
      %v2436 = vrot.slane %v2315, 2
      %v2437 = vsel %vm1260, %v2434, %v2436
      %v2438 = vrot.slane %v2316, 2
      %v2439 = vrot.slane %v2317, 2
      %v2440 = vsel %vm1260, %v2438, %v2439
      %v2441 = vrot.slane %v2318, 2
      %v2442 = vsel %vm1260, %v2439, %v2441
      %v2443 = vrot.slane %v2319, 2
      %v2444 = vrot.slane %v2320, 2
      %v2445 = vsel %vm1260, %v2443, %v2444
      %v2446 = vrot.slane %v2321, 2
      %v2447 = vsel %vm1260, %v2444, %v2446
      %v2448 = vrot.slane %v2322, 2
      %v2449 = vrot.slane %v2323, 2
      %v2450 = vsel %vm1260, %v2448, %v2449
      %v2451 = vrot.slane %v2324, 2
      %v2452 = vsel %vm1260, %v2449, %v2451
      %v2485 = vadd.f32 %v2241, %v2375
      %v2486 = vadd.f32 %v2242, %v2377
      %v2487 = vadd.f32 %v2243, %v2380
      %v2488 = vadd.f32 %v2244, %v2382
      %v2489 = vadd.f32 %v2245, %v2385
      %v2490 = vadd.f32 %v2246, %v2387
      %v2491 = vadd.f32 %v2247, %v2390
      %v2492 = vadd.f32 %v2248, %v2392
      %v2493 = vadd.f32 %v2249, %v2395
      %v2494 = vadd.f32 %v2250, %v2397
      %v2495 = vadd.f32 %v2251, %v2400
      %v2496 = vadd.f32 %v2252, %v2402
      %v2497 = vadd.f32 %v2253, %v2405
      %v2498 = vadd.f32 %v2254, %v2407
      %v2499 = vadd.f32 %v2255, %v2410
      %v2500 = vadd.f32 %v2256, %v2412
      %v2501 = vadd.f32 %v2257, %v2415
      %v2502 = vadd.f32 %v2258, %v2417
      %v2503 = vadd.f32 %v2259, %v2420
      %v2504 = vadd.f32 %v2260, %v2422
      %v2505 = vadd.f32 %v2261, %v2425
      %v2506 = vadd.f32 %v2262, %v2427
      %v2507 = vadd.f32 %v2263, %v2430
      %v2508 = vadd.f32 %v2264, %v2432
      %v2509 = vadd.f32 %v2265, %v2435
      %v2510 = vadd.f32 %v2266, %v2437
      %v2511 = vadd.f32 %v2267, %v2440
      %v2512 = vadd.f32 %v2268, %v2442
      %v2513 = vadd.f32 %v2269, %v2445
      %v2514 = vadd.f32 %v2270, %v2447
      %v2515 = vadd.f32 %v2271, %v2450
      %v2516 = vadd.f32 %v2272, %v2452
      %v2517 = vld [vmem:[%s4] sm:$0x1]
      %v2519 = vlaneseq
      %v2520 = vshrl.u32 %v2519, 7
      %v2521 = vsub.s32 0, %v2520
      %v2522 = vrot.slane %v2517, %v2521
      %v2524 = vadd.f32 %v2485, %v2522
      %v2525 = vadd.f32 %v2486, %v2522
      %v2526 = vadd.f32 %v2487, %v2522
      %v2527 = vadd.f32 %v2488, %v2522
      %v2528 = vadd.f32 %v2489, %v2522
      %v2529 = vadd.f32 %v2490, %v2522
      %v2530 = vadd.f32 %v2491, %v2522
      %v2531 = vadd.f32 %v2492, %v2522
      %v2532 = vadd.f32 %v2493, %v2522
      %v2533 = vadd.f32 %v2494, %v2522
      %v2534 = vadd.f32 %v2495, %v2522
      %v2535 = vadd.f32 %v2496, %v2522
      %v2536 = vadd.f32 %v2497, %v2522
      %v2537 = vadd.f32 %v2498, %v2522
      %v2538 = vadd.f32 %v2499, %v2522
      %v2539 = vadd.f32 %v2500, %v2522
      %v2540 = vadd.f32 %v2501, %v2522
      %v2541 = vadd.f32 %v2502, %v2522
      %v2542 = vadd.f32 %v2503, %v2522
      %v2543 = vadd.f32 %v2504, %v2522
      %v2544 = vadd.f32 %v2505, %v2522
      %v2545 = vadd.f32 %v2506, %v2522
      %v2546 = vadd.f32 %v2507, %v2522
      %v2547 = vadd.f32 %v2508, %v2522
      %v2548 = vadd.f32 %v2509, %v2522
      %v2549 = vadd.f32 %v2510, %v2522
      %v2550 = vadd.f32 %v2511, %v2522
      %v2551 = vadd.f32 %v2512, %v2522
      %v2552 = vadd.f32 %v2513, %v2522
      %v2553 = vadd.f32 %v2514, %v2522
      %v2554 = vadd.f32 %v2515, %v2522
      %v2555 = vadd.f32 %v2516, %v2522
      %v2556 = vmax.f32 %v2524, 0.0
      %v2557 = vmax.f32 %v2525, 0.0
      %v2558 = vmax.f32 %v2526, 0.0
      %v2559 = vmax.f32 %v2527, 0.0
      %v2560 = vmax.f32 %v2528, 0.0
      %v2561 = vmax.f32 %v2529, 0.0
      %v2562 = vmax.f32 %v2530, 0.0
      %v2563 = vmax.f32 %v2531, 0.0
      %v2564 = vmax.f32 %v2532, 0.0
      %v2565 = vmax.f32 %v2533, 0.0
      %v2566 = vmax.f32 %v2534, 0.0
      %v2567 = vmax.f32 %v2535, 0.0
      %v2568 = vmax.f32 %v2536, 0.0
      %v2569 = vmax.f32 %v2537, 0.0
      %v2570 = vmax.f32 %v2538, 0.0
      %v2571 = vmax.f32 %v2539, 0.0
      %v2572 = vmax.f32 %v2540, 0.0
      %v2573 = vmax.f32 %v2541, 0.0
      %v2574 = vmax.f32 %v2542, 0.0
      %v2575 = vmax.f32 %v2543, 0.0
      %v2576 = vmax.f32 %v2544, 0.0
      %v2577 = vmax.f32 %v2545, 0.0
      %v2578 = vmax.f32 %v2546, 0.0
      %v2579 = vmax.f32 %v2547, 0.0
      %v2580 = vmax.f32 %v2548, 0.0
      %v2581 = vmax.f32 %v2549, 0.0
      %v2582 = vmax.f32 %v2550, 0.0
      %v2583 = vmax.f32 %v2551, 0.0
      %v2584 = vmax.f32 %v2552, 0.0
      %v2585 = vmax.f32 %v2553, 0.0
      %v2586 = vmax.f32 %v2554, 0.0
      %v2587 = vmax.f32 %v2555, 0.0
      %v2588 = vmin.f32 %v2556, 6.0
      %v2589 = vmin.f32 %v2557, 6.0
      %v2590 = vmin.f32 %v2558, 6.0
      %v2591 = vmin.f32 %v2559, 6.0
      %v2592 = vmin.f32 %v2560, 6.0
      %v2593 = vmin.f32 %v2561, 6.0
      %v2594 = vmin.f32 %v2562, 6.0
      %v2595 = vmin.f32 %v2563, 6.0
      %v2596 = vmin.f32 %v2564, 6.0
      %v2597 = vmin.f32 %v2565, 6.0
      %v2598 = vmin.f32 %v2566, 6.0
      %v2599 = vmin.f32 %v2567, 6.0
      %v2600 = vmin.f32 %v2568, 6.0
      %v2601 = vmin.f32 %v2569, 6.0
      %v2602 = vmin.f32 %v2570, 6.0
      %v2603 = vmin.f32 %v2571, 6.0
      %v2604 = vmin.f32 %v2572, 6.0
      %v2605 = vmin.f32 %v2573, 6.0
      %v2606 = vmin.f32 %v2574, 6.0
      %v2607 = vmin.f32 %v2575, 6.0
      %v2608 = vmin.f32 %v2576, 6.0
      %v2609 = vmin.f32 %v2577, 6.0
      %v2610 = vmin.f32 %v2578, 6.0
      %v2611 = vmin.f32 %v2579, 6.0
      %v2612 = vmin.f32 %v2580, 6.0
      %v2613 = vmin.f32 %v2581, 6.0
      %v2614 = vmin.f32 %v2582, 6.0
      %v2615 = vmin.f32 %v2583, 6.0
      %v2616 = vmin.f32 %v2584, 6.0
      %v2617 = vmin.f32 %v2585, 6.0
      %v2618 = vmin.f32 %v2586, 6.0
      %v2619 = vmin.f32 %v2587, 6.0
      %v2620 = vld [vmem:[%s5] sm:$0xff]
      %v2621 = vld [vmem:[%s5 + $0x8] sm:$0xff]
      %v2622 = vld [vmem:[%s5 + $0x10] sm:$0xff]
      %v2623 = vld [vmem:[%s6] sm:$0x1]
      %v2625 = vlaneseq
      %v2626 = vshrl.u32 %v2625, 7
      %v2627 = vsub.s32 0, %v2626
      %v2628 = vrot.slane %v2623, %v2627
      %vm2630 = vcmask 195584
      %v2632 = vsel %vm2630, %v2588, 0
      %v2635 = vsel %vm2630, %v2589, 0
      %v2638 = vsel %vm2630, %v2590, 0
      %v2641 = vsel %vm2630, %v2591, 0
      %v2644 = vsel %vm2630, %v2592, 0
      %v2647 = vsel %vm2630, %v2593, 0
      %v2650 = vsel %vm2630, %v2594, 0
      %v2653 = vsel %vm2630, %v2595, 0
      %v2656 = vsel %vm2630, %v2596, 0
      %v2659 = vsel %vm2630, %v2597, 0
      %v2662 = vsel %vm2630, %v2598, 0
      %v2665 = vsel %vm2630, %v2599, 0
      %v2668 = vsel %vm2630, %v2600, 0
      %v2671 = vsel %vm2630, %v2601, 0
      %v2674 = vsel %vm2630, %v2602, 0
      %v2677 = vsel %vm2630, %v2603, 0
      %v2680 = vsel %vm2630, %v2604, 0
      %v2683 = vsel %vm2630, %v2605, 0
      %v2686 = vsel %vm2630, %v2606, 0
      %v2689 = vsel %vm2630, %v2607, 0
      %v2692 = vsel %vm2630, %v2608, 0
      %v2695 = vsel %vm2630, %v2609, 0
      %v2698 = vsel %vm2630, %v2610, 0
      %v2701 = vsel %vm2630, %v2611, 0
      %v2704 = vsel %vm2630, %v2612, 0
      %v2707 = vsel %vm2630, %v2613, 0
      %v2710 = vsel %vm2630, %v2614, 0
      %v2713 = vsel %vm2630, %v2615, 0
      %v2716 = vsel %vm2630, %v2616, 0
      %v2719 = vsel %vm2630, %v2617, 0
      %v2722 = vsel %vm2630, %v2618, 0
      %v2725 = vsel %vm2630, %v2619, 0
      %2727 = vmatprep.subr.mxu0 0.0
      %2728 = vmatpush1.msra.mxu0 %v2620
      %2729 = vmatprep.subr.mxu0 0.0
      %2730 = vmatpush1.msra.mxu0 %v2621
      %2731 = vmatprep.subr.mxu0 0.0
      %2732 = vmatpush1.msra.mxu0 %v2622
      %2733 = vmatprep.subr.mxu0 0.0
      %2734 = vmatpush1.msra.mxu0 0.0
      %2735 = vmatprep.subr.mxu0 0.0
      %2736 = vmatpush1.msra.mxu0 0.0
      %2737 = vmatprep.subr.mxu0 0.0
      %2738 = vmatpush1.msra.mxu0 0.0
      %2739 = vmatprep.subr.mxu0 0.0
      %2740 = vmatpush1.msra.mxu0 0.0
      %2741 = vmatprep.subr.mxu0 0.0
      %2742 = vmatpush1.msra.mxu0 0.0
      %2743 = vmatprep.subr.mxu0 0.0
      %2744 = vmatpush1.msra.mxu0 0.0
      %2745 = vmatprep.subr.mxu0 0.0
      %2746 = vmatpush1.msra.mxu0 0.0
      %2747 = vmatprep.subr.mxu0 0.0
      %2748 = vmatpush1.msra.mxu0 0.0
      %2749 = vmatprep.subr.mxu0 0.0
      %2750 = vmatpush1.msra.mxu0 0.0
      %2751 = vmatprep.subr.mxu0 0.0
      %2752 = vmatpush1.msra.mxu0 0.0
      %2753 = vmatprep.subr.mxu0 0.0
      %2754 = vmatpush1.msra.mxu0 0.0
      %2755 = vmatprep.subr.mxu0 0.0
      %2756 = vmatpush1.msra.mxu0 0.0
      %2757 = vmatprep.subr.mxu0 0.0
      %2758 = vmatpush1.msra.mxu0 0.0
      %2759 = vmatprep.subr.mxu0 0.0
      %2760 = vmatpush1.msra.mxu0 0.0
      %2761 = vmatprep.subr.mxu0 0.0
      %2762 = vmatpush1.msra.mxu0 0.0
      %2763 = vmatprep.subr.mxu0 0.0
      %2764 = vmatpush1.msra.mxu0 0.0
      %2765 = vmatprep.subr.mxu0 0.0
      %2766 = vmatpush1.msra.mxu0 0.0
      %2767 = vmatprep.subr.mxu0 0.0
      %2768 = vmatpush1.msra.mxu0 0.0
      %2769 = vmatprep.subr.mxu0 0.0
      %2770 = vmatpush1.msra.mxu0 0.0
      %2771 = vmatprep.subr.mxu0 0.0
      %2772 = vmatpush1.msra.mxu0 0.0
      %2773 = vmatprep.subr.mxu0 0.0
      %2774 = vmatpush1.msra.mxu0 0.0
      %2775 = vmatprep.subr.mxu0 0.0
      %2776 = vmatpush1.msra.mxu0 0.0
      %2777 = vmatprep.subr.mxu0 0.0
      %2778 = vmatpush1.msra.mxu0 0.0
      %2779 = vmatprep.subr.mxu0 0.0
      %2780 = vmatpush1.msra.mxu0 0.0
      %2781 = vmatprep.subr.mxu0 0.0
      %2782 = vmatpush1.msra.mxu0 0.0
      %2783 = vmatprep.subr.mxu0 0.0
      %2784 = vmatpush1.msra.mxu0 0.0
      %2785 = vmatprep.subr.mxu0 0.0
      %2786 = vmatpush1.msra.mxu0 0.0
      %2787 = vmatprep.subr.mxu0 0.0
      %2788 = vmatpush1.msra.mxu0 0.0
      %2789 = vmatprep.subr.mxu0 0.0
      %2790 = vmatpush1.msra.mxu0 0.0
      %2791 = vmatprep.mubr.f32.mxu0 0.0
      %2792 = vmatmul.mubr.f32.gmra.mrb[0].mxu0 %v2632
      %v2793 = vpop.f32.mrb[0].mxu0
      %v2794 = vadd.f32 %v2628, %v2793
      %v2795 = vpop.f32.mrb[0].mxu0
      %2796 = vmatprep.mubr.f32.mxu0 0.0
      %2797 = vmatmul.mubr.f32.gmra.mrb[0].mxu0 %v2635
      %v2798 = vpop.f32.mrb[0].mxu0
      %v2799 = vadd.f32 %v2628, %v2798
      %v2800 = vpop.f32.mrb[0].mxu0
      %2801 = vmatprep.mubr.f32.mxu0 0.0
      %2802 = vmatmul.mubr.f32.gmra.mrb[0].mxu0 %v2638
      %v2803 = vpop.f32.mrb[0].mxu0
      %v2804 = vadd.f32 %v2628, %v2803
      %v2805 = vpop.f32.mrb[0].mxu0
      %2806 = vmatprep.mubr.f32.mxu0 0.0
      %2807 = vmatmul.mubr.f32.gmra.mrb[0].mxu0 %v2641
      %v2808 = vpop.f32.mrb[0].mxu0
      %v2809 = vadd.f32 %v2628, %v2808
      %v2810 = vpop.f32.mrb[0].mxu0
      %2811 = vmatprep.mubr.f32.mxu0 0.0
      %2812 = vmatmul.mubr.f32.gmra.mrb[0].mxu0 %v2644
      %v2813 = vpop.f32.mrb[0].mxu0
      %v2814 = vadd.f32 %v2628, %v2813
      %v2815 = vpop.f32.mrb[0].mxu0
      %2816 = vmatprep.mubr.f32.mxu0 0.0
      %2817 = vmatmul.mubr.f32.gmra.mrb[0].mxu0 %v2647
      %v2818 = vpop.f32.mrb[0].mxu0
      %v2819 = vadd.f32 %v2628, %v2818
      %v2820 = vpop.f32.mrb[0].mxu0
      %2821 = vmatprep.mubr.f32.mxu0 0.0
      %2822 = vmatmul.mubr.f32.gmra.mrb[0].mxu0 %v2650
      %v2823 = vpop.f32.mrb[0].mxu0
      %v2824 = vadd.f32 %v2628, %v2823
      %v2825 = vpop.f32.mrb[0].mxu0
      %2826 = vmatprep.mubr.f32.mxu0 0.0
      %2827 = vmatmul.mubr.f32.gmra.mrb[0].mxu0 %v2653
      %v2828 = vpop.f32.mrb[0].mxu0
      %v2829 = vadd.f32 %v2628, %v2828
      %v2830 = vpop.f32.mrb[0].mxu0
      %2831 = vmatprep.mubr.f32.mxu0 0.0
      %2832 = vmatmul.mubr.f32.gmra.mrb[0].mxu0 %v2656
      %v2833 = vpop.f32.mrb[0].mxu0
      %v2834 = vadd.f32 %v2628, %v2833
      %v2835 = vpop.f32.mrb[0].mxu0
      %2836 = vmatprep.mubr.f32.mxu0 0.0
      %2837 = vmatmul.mubr.f32.gmra.mrb[0].mxu0 %v2659
      %v2838 = vpop.f32.mrb[0].mxu0
      %v2839 = vadd.f32 %v2628, %v2838
      %v2840 = vpop.f32.mrb[0].mxu0
      %2841 = vmatprep.mubr.f32.mxu0 0.0
      %2842 = vmatmul.mubr.f32.gmra.mrb[0].mxu0 %v2662
      %v2843 = vpop.f32.mrb[0].mxu0
      %v2844 = vadd.f32 %v2628, %v2843
      %v2845 = vpop.f32.mrb[0].mxu0
      %2846 = vmatprep.mubr.f32.mxu0 0.0
      %2847 = vmatmul.mubr.f32.gmra.mrb[0].mxu0 %v2665
      %v2848 = vpop.f32.mrb[0].mxu0
      %v2849 = vadd.f32 %v2628, %v2848
      %v2850 = vpop.f32.mrb[0].mxu0
      %2851 = vmatprep.mubr.f32.mxu0 0.0
      %2852 = vmatmul.mubr.f32.gmra.mrb[0].mxu0 %v2668
      %v2853 = vpop.f32.mrb[0].mxu0
      %v2854 = vadd.f32 %v2628, %v2853
      %v2855 = vpop.f32.mrb[0].mxu0
      %2856 = vmatprep.mubr.f32.mxu0 0.0
      %2857 = vmatmul.mubr.f32.gmra.mrb[0].mxu0 %v2671
      %v2858 = vpop.f32.mrb[0].mxu0
      %v2859 = vadd.f32 %v2628, %v2858
      %v2860 = vpop.f32.mrb[0].mxu0
      %2861 = vmatprep.mubr.f32.mxu0 0.0
      %2862 = vmatmul.mubr.f32.gmra.mrb[0].mxu0 %v2674
      %v2863 = vpop.f32.mrb[0].mxu0
      %v2864 = vadd.f32 %v2628, %v2863
      %v2865 = vpop.f32.mrb[0].mxu0
      %2866 = vmatprep.mubr.f32.mxu0 0.0
      %2867 = vmatmul.mubr.f32.gmra.mrb[0].mxu0 %v2677
      %v2868 = vpop.f32.mrb[0].mxu0
      %v2869 = vadd.f32 %v2628, %v2868
      %v2870 = vpop.f32.mrb[0].mxu0
      %2871 = vmatprep.mubr.f32.mxu0 0.0
      %2872 = vmatmul.mubr.f32.gmra.mrb[0].mxu0 %v2680
      %v2873 = vpop.f32.mrb[0].mxu0
      %v2874 = vadd.f32 %v2628, %v2873
      %v2875 = vpop.f32.mrb[0].mxu0
      %2876 = vmatprep.mubr.f32.mxu0 0.0
      %2877 = vmatmul.mubr.f32.gmra.mrb[0].mxu0 %v2683
      %v2878 = vpop.f32.mrb[0].mxu0
      %v2879 = vadd.f32 %v2628, %v2878
      %v2880 = vpop.f32.mrb[0].mxu0
      %2881 = vmatprep.mubr.f32.mxu0 0.0
      %2882 = vmatmul.mubr.f32.gmra.mrb[0].mxu0 %v2686
      %v2883 = vpop.f32.mrb[0].mxu0
      %v2884 = vadd.f32 %v2628, %v2883
      %v2885 = vpop.f32.mrb[0].mxu0
      %2886 = vmatprep.mubr.f32.mxu0 0.0
      %2887 = vmatmul.mubr.f32.gmra.mrb[0].mxu0 %v2689
      %v2888 = vpop.f32.mrb[0].mxu0
      %v2889 = vadd.f32 %v2628, %v2888
      %v2890 = vpop.f32.mrb[0].mxu0
      %2891 = vmatprep.mubr.f32.mxu0 0.0
      %2892 = vmatmul.mubr.f32.gmra.mrb[0].mxu0 %v2692
      %v2893 = vpop.f32.mrb[0].mxu0
      %v2894 = vadd.f32 %v2628, %v2893
      %v2895 = vpop.f32.mrb[0].mxu0
      %2896 = vmatprep.mubr.f32.mxu0 0.0
      %2897 = vmatmul.mubr.f32.gmra.mrb[0].mxu0 %v2695
      %v2898 = vpop.f32.mrb[0].mxu0
      %v2899 = vadd.f32 %v2628, %v2898
      %v2900 = vpop.f32.mrb[0].mxu0
      %2901 = vmatprep.mubr.f32.mxu0 0.0
      %2902 = vmatmul.mubr.f32.gmra.mrb[0].mxu0 %v2698
      %v2903 = vpop.f32.mrb[0].mxu0
      %v2904 = vadd.f32 %v2628, %v2903
      %v2905 = vpop.f32.mrb[0].mxu0
      %2906 = vmatprep.mubr.f32.mxu0 0.0
      %2907 = vmatmul.mubr.f32.gmra.mrb[0].mxu0 %v2701
      %v2908 = vpop.f32.mrb[0].mxu0
      %v2909 = vadd.f32 %v2628, %v2908
      %v2910 = vpop.f32.mrb[0].mxu0
      %2911 = vmatprep.mubr.f32.mxu0 0.0
      %2912 = vmatmul.mubr.f32.gmra.mrb[0].mxu0 %v2704
      %v2913 = vpop.f32.mrb[0].mxu0
      %v2914 = vadd.f32 %v2628, %v2913
      %v2915 = vpop.f32.mrb[0].mxu0
      %2916 = vmatprep.mubr.f32.mxu0 0.0
      %2917 = vmatmul.mubr.f32.gmra.mrb[0].mxu0 %v2707
      %v2918 = vpop.f32.mrb[0].mxu0
      %v2919 = vadd.f32 %v2628, %v2918
      %v2920 = vpop.f32.mrb[0].mxu0
      %2921 = vmatprep.mubr.f32.mxu0 0.0
      %2922 = vmatmul.mubr.f32.gmra.mrb[0].mxu0 %v2710
      %v2923 = vpop.f32.mrb[0].mxu0
      %v2924 = vadd.f32 %v2628, %v2923
      %v2925 = vpop.f32.mrb[0].mxu0
      %2926 = vmatprep.mubr.f32.mxu0 0.0
      %2927 = vmatmul.mubr.f32.gmra.mrb[0].mxu0 %v2713
      %v2928 = vpop.f32.mrb[0].mxu0
      %v2929 = vadd.f32 %v2628, %v2928
      %v2930 = vpop.f32.mrb[0].mxu0
      %2931 = vmatprep.mubr.f32.mxu0 0.0
      %2932 = vmatmul.mubr.f32.gmra.mrb[0].mxu0 %v2716
      %v2933 = vpop.f32.mrb[0].mxu0
      %v2934 = vadd.f32 %v2628, %v2933
      %v2935 = vpop.f32.mrb[0].mxu0
      %2936 = vmatprep.mubr.f32.mxu0 0.0
      %2937 = vmatmul.mubr.f32.gmra.mrb[0].mxu0 %v2719
      %v2938 = vpop.f32.mrb[0].mxu0
      %v2939 = vadd.f32 %v2628, %v2938
      %v2940 = vpop.f32.mrb[0].mxu0
      %2941 = vmatprep.mubr.f32.mxu0 0.0
      %2942 = vmatmul.mubr.f32.gmra.mrb[0].mxu0 %v2722
      %v2943 = vpop.f32.mrb[0].mxu0
      %v2944 = vadd.f32 %v2628, %v2943
      %v2945 = vpop.f32.mrb[0].mxu0
      %2946 = vmatprep.mubr.f32.mxu0 0.0
      %2947 = vmatmul.mubr.f32.gmra.mrb[0].mxu0 %v2725
      %v2948 = vpop.f32.mrb[0].mxu0
      %v2949 = vadd.f32 %v2628, %v2948
      %v2950 = vpop.f32.mrb[0].mxu0
      %2951 = vdwg.mxu0
      %v2952 = vadd.f32 %v2794, %v279
      %v2953 = vadd.f32 %v2799, %v280
      %v2954 = vadd.f32 %v2804, %v281
      %v2955 = vadd.f32 %v2809, %v282
      %v2956 = vadd.f32 %v2814, %v283
      %v2957 = vadd.f32 %v2819, %v284
      %v2958 = vadd.f32 %v2824, %v285
      %v2959 = vadd.f32 %v2829, %v286
      %v2960 = vadd.f32 %v2834, %v287
      %v2961 = vadd.f32 %v2839, %v288
      %v2962 = vadd.f32 %v2844, %v289
      %v2963 = vadd.f32 %v2849, %v290
      %v2964 = vadd.f32 %v2854, %v291
      %v2965 = vadd.f32 %v2859, %v292
      %v2966 = vadd.f32 %v2864, %v293
      %v2967 = vadd.f32 %v2869, %v294
      %v2968 = vadd.f32 %v2874, %v295
      %v2969 = vadd.f32 %v2879, %v296
      %v2970 = vadd.f32 %v2884, %v297
      %v2971 = vadd.f32 %v2889, %v298
      %v2972 = vadd.f32 %v2894, %v299
      %v2973 = vadd.f32 %v2899, %v300
      %v2974 = vadd.f32 %v2904, %v301
      %v2975 = vadd.f32 %v2909, %v302
      %v2976 = vadd.f32 %v2914, %v303
      %v2977 = vadd.f32 %v2919, %v304
      %v2978 = vadd.f32 %v2924, %v305
      %v2979 = vadd.f32 %v2929, %v306
      %v2980 = vadd.f32 %v2934, %v307
      %v2981 = vadd.f32 %v2939, %v308
      %v2982 = vadd.f32 %v2944, %v309
      %v2983 = vadd.f32 %v2949, %v310
      %2984 = vst.msk [vmem:[%s278] sm:$0xff] %vm319, %v2952
      %2985 = vst.msk [vmem:[%s278 + $0x8] sm:$0xff] %vm319, %v2953
      %2986 = vst.msk [vmem:[%s278 + $0x10] sm:$0xff] %vm319, %v2954
      %2987 = vst.msk [vmem:[%s278 + $0x18] sm:$0xff] %vm319, %v2955
      %2988 = vst.msk [vmem:[%s278 + $0x20] sm:$0xff] %vm319, %v2956
      %2989 = vst.msk [vmem:[%s278 + $0x28] sm:$0xff] %vm319, %v2957
      %2990 = vst.msk [vmem:[%s278 + $0x30] sm:$0xff] %vm319, %v2958
      %2991 = vst.msk [vmem:[%s278 + $0x38] sm:$0xff] %vm319, %v2959
      %2992 = vst.msk [vmem:[%s278 + $0x40] sm:$0xff] %vm319, %v2960
      %2993 = vst.msk [vmem:[%s278 + $0x48] sm:$0xff] %vm319, %v2961
      %2994 = vst.msk [vmem:[%s278 + $0x50] sm:$0xff] %vm319, %v2962
      %2995 = vst.msk [vmem:[%s278 + $0x58] sm:$0xff] %vm319, %v2963
      %2996 = vst.msk [vmem:[%s278 + $0x60] sm:$0xff] %vm319, %v2964
      %2997 = vst.msk [vmem:[%s278 + $0x68] sm:$0xff] %vm319, %v2965
      %2998 = vst.msk [vmem:[%s278 + $0x70] sm:$0xff] %vm319, %v2966
      %2999 = vst.msk [vmem:[%s278 + $0x78] sm:$0xff] %vm319, %v2967
      %3000 = vst.msk [vmem:[%s278 + $0x80] sm:$0xff] %vm319, %v2968
      %3001 = vst.msk [vmem:[%s278 + $0x88] sm:$0xff] %vm319, %v2969
      %3002 = vst.msk [vmem:[%s278 + $0x90] sm:$0xff] %vm319, %v2970
      %3003 = vst.msk [vmem:[%s278 + $0x98] sm:$0xff] %vm319, %v2971
      %3004 = vst.msk [vmem:[%s278 + $0xa0] sm:$0xff] %vm319, %v2972
      %3005 = vst.msk [vmem:[%s278 + $0xa8] sm:$0xff] %vm319, %v2973
      %3006 = vst.msk [vmem:[%s278 + $0xb0] sm:$0xff] %vm319, %v2974
      %3007 = vst.msk [vmem:[%s278 + $0xb8] sm:$0xff] %vm319, %v2975
      %3008 = vst.msk [vmem:[%s278 + $0xc0] sm:$0xff] %vm319, %v2976
      %3009 = vst.msk [vmem:[%s278 + $0xc8] sm:$0xff] %vm319, %v2977
      %3010 = vst.msk [vmem:[%s278 + $0xd0] sm:$0xff] %vm319, %v2978
      %3011 = vst.msk [vmem:[%s278 + $0xd8] sm:$0xff] %vm319, %v2979
      %3012 = vst.msk [vmem:[%s278 + $0xe0] sm:$0xff] %vm319, %v2980
      %3013 = vst.msk [vmem:[%s278 + $0xe8] sm:$0xff] %vm319, %v2981
      %3014 = vst.msk [vmem:[%s278 + $0xf0] sm:$0xff] %vm319, %v2982
      %3015 = vst.msk [vmem:[%s278 + $0xf8] sm:$0xff] %vm319, %v2983
      %p3016 = scmp.lt.s32.totalorder %s18, 1
      %s3017 = scalar_select %p3016, %s18, 1
      %s3018 = smul.addr %s3017, 32
      %s3019 = smul.addr %s3018, 8
      %s3020 = scalar_lea.vmem %s7, %s3019
      // Predicated region
      $region49: #{tpu_custom_call.1} parent=47 // pred_check
        %p3021 = pneg %p188
      $region50: #{tpu_custom_call.1} parent=47 // pred_check_branch
        %3023 = sbr.rel (%p3021) target = $region52
      $region51: #{tpu_custom_call.1} parent=47 // pred_region
        _
      $region52: #{tpu_custom_call.1} parent=47 // pred_fallthru
        _
    $region48: #{tpu_custom_call.1} parent=5 // pred_fallthru
      _
    %p3024 = scmp.le.s32.totalorder 2, %s13
    // Predicated region
    $region53: #{tpu_custom_call.1} parent=5 // pred_check
      %p3025 = pneg %p3024
    $region54: #{tpu_custom_call.1} parent=5 // pred_check_branch
      %3027 = sbr.rel (%p3025) target = $region56
    $region55: #{tpu_custom_call.1} parent=5 // pred_region
      %s3028 = ssub.s32 %s13, 2
      // Predicated region
      $region57: #{tpu_custom_call.1} parent=55 // pred_check
        %p3029 = pneg %p194
      $region58: #{tpu_custom_call.1} parent=55 // pred_check_branch
        %3031 = sbr.rel (%p3029) target = $region60
      $region59: #{tpu_custom_call.1} parent=55 // pred_region
        %p3032 = scmp.lt.s32.totalorder %s19, 1
        %s3033 = scalar_select %p3032, %s19, 1
        %s3034 = smul.addr %s3033, 32
        %s3035 = smul.addr %s3034, 8
        %s3036 = scalar_lea.vmem %s7, %s3035
      $region60: #{tpu_custom_call.1} parent=55 // pred_fallthru
        _
    $region56: #{tpu_custom_call.1} parent=5 // pred_fallthru
      _
  $region6: #{tpu_custom_call.1} parent=0 // loop_footer
    %s17 = sadd.s32 1, %s13
  $region7: #{tpu_custom_call.1} parent=0 // loop_footer_branch
    %12 = sbr.rel target = $region3
  $region8: #{tpu_custom_call.1} parent=0 // loop_exit
    _

</llo_original>
